<compile_context>
chip_gen: v7x
topology: tpu7x:2x2x1
jax: 0.10.0
libtpu: 0.0.40
codegen_flags: <defaults>
</compile_context>

<pallas_src>
import functools

import jax
import jax.numpy as jnp
from jax.experimental import pallas as pl
from jax.experimental.pallas import tpu as pltpu


VP_OUT = 128                       # lane-dense width of the fused-predictor slab


# --------------------------------------------------------------------------
# backend probes (safe fallbacks keep the script runnable everywhere)
# --------------------------------------------------------------------------
def _vmem_limit_bytes():
    try:
        info = pltpu.get_tpu_info()
        cap = getattr(info, "vmem_capacity_bytes", None)
        if cap is None:
            cap = getattr(info, "vmem_size_bytes", None)
        if cap is None:
            return 40 * 1024 * 1024
        if cap >= 100 * 1024 * 1024:       # v5e / v6e (128 MiB physical)
            return 96 * 1024 * 1024
        return 44 * 1024 * 1024            # v7x (64 MiB physical)
    except Exception:
        return 40 * 1024 * 1024


VMEM_LIMIT = _vmem_limit_bytes()


def _probe_weight_pipeline():
    """pl.Buffered(1) for replicated (constant index-map) weights if supported."""
    if not hasattr(pl, "Buffered"):
        return None
    try:
        mode = pl.Buffered(1)

        def _k(x_ref, w_ref, o_ref, tmp_ref):
            tmp_ref[...] = x_ref[...] + w_ref[...]
            o_ref[...] = tmp_ref[...]

        x = jnp.ones((16, 128), jnp.float32)
        w = jnp.ones((8, 128), jnp.float32)
        out = pl.pallas_call(
            _k,
            out_shape=jax.ShapeDtypeStruct((16, 128), jnp.float32),
            grid=(2,),
            in_specs=[pl.BlockSpec((8, 128), lambda i: (i, 0)),
                      pl.BlockSpec((8, 128), lambda i: (0, 0),
                                   pipeline_mode=mode)],
            out_specs=pl.BlockSpec((8, 128), lambda i: (i, 0)),
            scratch_shapes=[pltpu.VMEM((8, 128), jnp.float32)],
        )(x, w)
        jax.block_until_ready(out)
        return mode
    except Exception:
        return None


_WEIGHT_PIPELINE = _probe_weight_pipeline()


# --------------------------------------------------------------------------
# helpers
# --------------------------------------------------------------------------
def _layer_norm(x, g, b, eps=1e-5):
    mu = jnp.mean(x, axis=-1, keepdims=True)
    var = jnp.mean(jnp.square(x - mu), axis=-1, keepdims=True)
    return (x - mu) * jax.lax.rsqrt(var + eps) * g + b


def _bf16(w):
    return w.astype(jnp.bfloat16)


def _pick_tile(n, pref):
    """Largest tile <= pref that divides n (multiple of 8), else n."""
    if n <= pref:
        return n
    for c in (pref, pref // 2, pref // 4, 128, 64, 32, 16, 8):
        if c >= 8 and n % c == 0:
            return c
    return n


def _rep_spec(shape):
    """BlockSpec for a weight replicated across the whole grid."""
    n = len(shape)
    idx = lambda *_: (0,) * n
    if _WEIGHT_PIPELINE is not None:
        return pl.BlockSpec(shape, idx, pipeline_mode=_WEIGHT_PIPELINE)
    return pl.BlockSpec(shape, idx)


def _cparams(dims):
    return pltpu.CompilerParams(dimension_semantics=dims,
                                vmem_limit_bytes=VMEM_LIMIT)


# --------------------------------------------------------------------------
# Pallas kernels
# --------------------------------------------------------------------------
def encoder_kernel(x_ref, pad_ref, nb_ref, wqkv_ref, wo_ref,
                   w1_ref, b1_ref, w2_ref, b2_ref,
                   ln1g_ref, ln1b_ref, ln2g_ref, ln2b_ref,
                   o_ref, qkv_buf, att_buf, *, n_layers, n_heads, kv_tile):
    """Whole FastSpeech encoder stack for one batch element.

    Fused QKV projection (H, 3H) per layer, flash attention over KV chunks of
    size kv_tile (online softmax), head outputs lane-packed into att_buf and
    run through a single (H, H) output projection, then the FFN block.
    """
    T, H = x_ref.shape[1], x_ref.shape[2]
    d = H // n_heads
    n_kv = T // kv_tile
    keep = 1.0 - pad_ref[0]                                 # (T, 1) f32

    def layer_body(l, x):
        xb = x.astype(jnp.bfloat16)
        # fused Q|K|V projection; stored bf16 (halves VMEM + reload traffic)
        qkv_buf[...] = jnp.dot(
            xb, wqkv_ref[l], preferred_element_type=jnp.float32
        ).astype(jnp.bfloat16)

        for h in range(n_heads):                            # short, unrolled
            q = qkv_buf[:, h * d:(h + 1) * d]               # (T, d) bf16, scaled

            def kv_body(c, carry):
                m, lsum, acc = carry
                start = pl.multiple_of(c * kv_tile, kv_tile)
                k_c = qkv_buf[pl.ds(start, kv_tile), H + h * d:H + (h + 1) * d]
                v_c = qkv_buf[pl.ds(start, kv_tile),
                              2 * H + h * d:2 * H + (h + 1) * d]
                s = jax.lax.dot_general(
                    q, k_c, (((1,), (1,)), ((), ())),
                    preferred_element_type=jnp.float32)     # (T, kv_tile)
                s = s + nb_ref[0, c]                        # additive key bias
                m_new = jnp.maximum(m, jnp.max(s, axis=-1, keepdims=True))
                alpha = jnp.exp(m - m_new)                  # EUP
                p = jnp.exp(s - m_new)                      # EUP
                lsum = alpha * lsum + jnp.sum(p, axis=-1, keepdims=True)  # XLU
                acc = alpha * acc + jnp.dot(
                    p.astype(jnp.bfloat16), v_c,
                    preferred_element_type=jnp.float32)
                return m_new, lsum, acc

            m0 = jnp.full((T, 1), -1e30, jnp.float32)
            l0 = jnp.zeros((T, 1), jnp.float32)
            a0 = jnp.zeros((T, d), jnp.float32)
            _, l_f, acc_f = jax.lax.fori_loop(0, n_kv, kv_body, (m0, l0, a0))
            ah = acc_f * pl.reciprocal(l_f, approx=True)    # EUP reciprocal
            att_buf[:, h * d:(h + 1) * d] = ah.astype(jnp.bfloat16)

        # single fused output projection over all heads
        att = jnp.dot(att_buf[...], wo_ref[l], preferred_element_type=jnp.float32)
        y = _layer_norm(x + att, ln1g_ref[l], ln1b_ref[l]) * keep
        f = jax.nn.relu(jnp.dot(y.astype(jnp.bfloat16), w1_ref[l],
                                preferred_element_type=jnp.float32) + b1_ref[l])
        f = jnp.dot(f.astype(jnp.bfloat16), w2_ref[l],
                    preferred_element_type=jnp.float32) + b2_ref[l]
        return _layer_norm(y + f, ln2g_ref[l], ln2b_ref[l]) * keep

    o_ref[0] = jax.lax.fori_loop(0, n_layers, layer_body, x_ref[0])


def var_predictor_kernel(x_ref, spk_ref, pad_ref,
                         c1m_ref, c10_ref, c1p_ref, cb1_ref, ln1g_ref, ln1b_ref,
                         c2m_ref, c20_ref, c2p_ref, cb2_ref, ln2g_ref, ln2b_ref,
                         wl_ref, bl_ref, o_ref, *, n_pred):
    """Three fused FastSpeech2 variance predictors (dur / pitch / energy).

    Each: (conv3 + ReLU + LN) x 2 + linear, masked. The three 1-wide linear
    heads are packed into one lane-dense (T, VP_OUT) output slab (predictor p
    owns column p). The speaker embedding add is folded in here.
    NOTE: padded positions leak into neighbors through the k=3 conv shifts
    (only the final output is masked) — matches common FastSpeech2 impls.
    """
    x = x_ref[0] + spk_ref[0]                               # (T, H) + (1, H)
    keep = 1.0 - pad_ref[0]                                 # (T, 1)
    T = x.shape[0]
    out_w = o_ref.shape[-1]

    rows = jax.lax.broadcasted_iota(jnp.int32, (T, 1), 0)
    not_first = (rows > 0).astype(jnp.float32)              # zero the wrapped row
    not_last = (rows < T - 1).astype(jnp.float32)

    def conv3(h, wm, w0, wp, b):
        hp = pltpu.roll(h, shift=1, axis=0) * not_first      # h[i-1]
        hn = pltpu.roll(h, shift=T - 1, axis=0) * not_last   # h[i+1]
        return (jnp.dot(hp.astype(jnp.bfloat16), wm,
                        preferred_element_type=jnp.float32)
                + jnp.dot(h.astype(jnp.bfloat16), w0,
                          preferred_element_type=jnp.float32)
                + jnp.dot(hn.astype(jnp.bfloat16), wp,
                          preferred_element_type=jnp.float32) + b)

    def pred_body(p, acc):
        h1 = jax.nn.relu(conv3(x, c1m_ref[p], c10_ref[p], c1p_ref[p], cb1_ref[p]))
        h1 = _layer_norm(h1, ln1g_ref[p], ln1b_ref[p])
        h2 = jax.nn.relu(conv3(h1, c2m_ref[p], c20_ref[p], c2p_ref[p], cb2_ref[p]))
        h2 = _layer_norm(h2, ln2g_ref[p], ln2b_ref[p])
        # wl_ref[p] is (H, out_w) with the real weight vector in column p
        return acc + jnp.dot(h2.astype(jnp.bfloat16), wl_ref[p],
                             preferred_element_type=jnp.float32)

    acc = jax.lax.fori_loop(0, n_pred, pred_body,
                            jnp.zeros((T, out_w), jnp.float32))
    o_ref[0] = (acc + bl_ref[...]) * keep                    # masked_fill(mask, 0)


def diffusion_kernel(coef_ref, x0_ref, n1_ref, n2_ref, cond_ref, emb_ref,
                     spk_ref, temb_ref, mask_ref,
                     wx_ref, wc_ref, wt_ref, b1_ref, wo_ref, bo_ref, o_ref,
                     *, m_pad):
    """GaussianDiffusion training branch: q_sample(t), q_sample(t-1),
    denoiser (x0 prediction) and posterior-mean x_{t-1} prediction.

    Conditioning adds (pitch/energy embeddings + speaker emb) are folded in
    here. The four (tt, M) results are stored at 128-aligned column offsets
    of a lane-dense (tt, 4*m_pad) slab — no concatenate / relayout.
    `coef` lives in SMEM ((B,6) table; pads to one SMEM tile).
    """
    b = pl.program_id(0)
    s_ac_t = coef_ref[b, 0]
    s_om_t = coef_ref[b, 1]
    s_ac_p = coef_ref[b, 2]
    s_om_p = coef_ref[b, 3]
    pc1 = coef_ref[b, 4]
    pc2 = coef_ref[b, 5]

    x0 = x0_ref[0]                                           # (tt, M)
    n1 = n1_ref[0]
    n2 = n2_ref[0]
    keep = 1.0 - mask_ref[0]                                 # (tt, 1)
    M = x0.shape[-1]

    x_t = (s_ac_t * x0 + s_om_t * n1) * keep
    x_tp = (s_ac_p * x0 + s_om_p * n2) * keep

    # variance-adaptor output (masked) + speaker conditioning for the denoiser
    cond = (cond_ref[0] + emb_ref[0] + spk_ref[0]) * keep + spk_ref[0]
    temb = temb_ref[0]                                       # (1, H)

    h = jnp.dot(x_t.astype(jnp.bfloat16), wx_ref[...],
                preferred_element_type=jnp.float32)
    h = h + jnp.dot(cond.astype(jnp.bfloat16), wc_ref[...],
                    preferred_element_type=jnp.float32)
    h = h + jnp.dot(temb.astype(jnp.bfloat16), wt_ref[...],
                    preferred_element_type=jnp.float32)
    h = jax.nn.relu(h + b1_ref[...])
    x0_pred = jnp.dot(h.astype(jnp.bfloat16), wo_ref[...],
                      preferred_element_type=jnp.float32) + bo_ref[...]
    x0_pred = jnp.clip(x0_pred, -1.0, 1.0) * keep

    x_tpp = (pc1 * x0_pred + pc2 * x_t) * keep

    for i, piece in enumerate((x0_pred, x_t, x_tp, x_tpp)):
        o_ref[0, :, i * m_pad:i * m_pad + M] = piece


# --------------------------------------------------------------------------
# pallas_call wrappers
# --------------------------------------------------------------------------
def run_encoder(x, pad_f, key_bias_chunks, enc, *, n_layers, n_heads):
    B, T, H = x.shape
    n_kv = key_bias_chunks.shape[1]
    kv_tile = key_bias_chunks.shape[3]
    d = H // n_heads
    scale = 1.0 / float(d) ** 0.5
    # fold 1/sqrt(d) into the Q columns of the fused QKV weight
    col_scale = jnp.concatenate([jnp.full((H,), scale, jnp.float32),
                                 jnp.ones((2 * H,), jnp.float32)])
    weights = [_bf16(enc["wqkv"] * col_scale), _bf16(enc["wo"]),
               _bf16(enc["w1"]), enc["b1"], _bf16(enc["w2"]), enc["b2"],
               enc["ln1g"], enc["ln1b"], enc["ln2g"], enc["ln2b"]]
    in_specs = ([pl.BlockSpec((1, T, H), lambda b: (b, 0, 0)),
                 pl.BlockSpec((1, T, 1), lambda b: (b, 0, 0)),
                 pl.BlockSpec((1, n_kv, 1, kv_tile), lambda b: (b, 0, 0, 0))]
                + [_rep_spec(w.shape) for w in weights])
    return pl.pallas_call(
        functools.partial(encoder_kernel, n_layers=n_layers,
                          n_heads=n_heads, kv_tile=kv_tile),
        out_shape=jax.ShapeDtypeStruct((B, T, H), jnp.float32),
        grid=(B,),
        in_specs=in_specs,
        out_specs=pl.BlockSpec((1, T, H), lambda b: (b, 0, 0)),
        scratch_shapes=[pltpu.VMEM((T, 3 * H), jnp.bfloat16),   # fused QKV
                        pltpu.VMEM((T, H), jnp.bfloat16)],      # packed heads
        compiler_params=_cparams(("parallel",)),
    )(x, pad_f, key_bias_chunks, *weights)


def run_var_predictors(x, spk, pad_f, vp):
    """One fused pallas_call producing (log_dur, pitch, energy) predictions."""
    B, T, H = x.shape
    out_w = vp["wl"].shape[-1]
    weights = [_bf16(vp["c1m"]), _bf16(vp["c10"]), _bf16(vp["c1p"]), vp["cb1"],
               vp["ln1g"], vp["ln1b"],
               _bf16(vp["c2m"]), _bf16(vp["c20"]), _bf16(vp["c2p"]), vp["cb2"],
               vp["ln2g"], vp["ln2b"], _bf16(vp["wl"]), vp["bl"]]
    in_specs = ([pl.BlockSpec((1, T, H), lambda b: (b, 0, 0)),
                 pl.BlockSpec((1, 1, H), lambda b: (b, 0, 0)),
                 pl.BlockSpec((1, T, 1), lambda b: (b, 0, 0))]
                + [_rep_spec(w.shape) for w in weights])
    out = pl.pallas_call(
        functools.partial(var_predictor_kernel, n_pred=3),
        out_shape=jax.ShapeDtypeStruct((B, T, out_w), jnp.float32),
        grid=(B,),
        in_specs=in_specs,
        out_specs=pl.BlockSpec((1, T, out_w), lambda b: (b, 0, 0)),
        compiler_params=_cparams(("parallel",)),
    )(x, spk.reshape(B, 1, H), pad_f, *weights)
    # column 0: log-duration, 1: pitch, 2: energy
    return out[:, :, 0], out[:, :, 1], out[:, :, 2]


def run_diffusion(coef, x0, n1, n2, cond_base, emb_add, spk, temb,
                  mel_pad_f, dn):
    B, Tm, M = x0.shape
    H = cond_base.shape[-1]
    m_pad = ((M + 127) // 128) * 128
    out_w = 4 * m_pad
    tt = _pick_tile(Tm, 256)
    n_t = Tm // tt
    weights = [_bf16(dn["wx"]), _bf16(dn["wc"]), _bf16(dn["wt"]), dn["b1"],
               _bf16(dn["wo"]), dn["bo"]]
    in_specs = ([pl.BlockSpec(memory_space=pltpu.MemorySpace.SMEM),   # coef
                 pl.BlockSpec((1, tt, M), lambda b, t: (b, t, 0)),
                 pl.BlockSpec((1, tt, M), lambda b, t: (b, t, 0)),
                 pl.BlockSpec((1, tt, M), lambda b, t: (b, t, 0)),
                 pl.BlockSpec((1, tt, H), lambda b, t: (b, t, 0)),
                 pl.BlockSpec((1, tt, H), lambda b, t: (b, t, 0)),
                 pl.BlockSpec((1, 1, H), lambda b, t: (b, 0, 0)),
                 pl.BlockSpec((1, 1, H), lambda b, t: (b, 0, 0)),
                 pl.BlockSpec((1, tt, 1), lambda b, t: (b, t, 0))]
                + [_rep_spec(w.shape) for w in weights])
    packed = pl.pallas_call(
        functools.partial(diffusion_kernel, m_pad=m_pad),
        out_shape=jax.ShapeDtypeStruct((B, Tm, out_w), jnp.float32),
        grid=(B, n_t),
        in_specs=in_specs,
        out_specs=pl.BlockSpec((1, tt, out_w), lambda b, t: (b, t, 0)),
        compiler_params=_cparams(("parallel", "parallel")),
    )(coef, x0, n1, n2, cond_base, emb_add, spk.reshape(B, 1, H),
      temb.reshape(B, 1, H), mel_pad_f, *weights)
    sl = lambda i: packed[:, :, i * m_pad:i * m_pad + M]
    return sl(0), sl(1), sl(2), sl(3)


# --------------------------------------------------------------------------
# glue (params, masks, embeddings, length regulator, diffusion schedule)
# --------------------------------------------------------------------------
def init_params(key, V, H, Hff, M, spk_dim, n_bins, n_layers=2, n_heads=2):
    keys = iter(jax.random.split(key, 64))

    def nrm(shape, scale=0.05):
        return (scale * jax.random.normal(next(keys), shape)).astype(jnp.float32)

    L = n_layers
    P = 3   # fused predictors: 0 = duration, 1 = pitch, 2 = energy

    params = {
        "n_layers": n_layers,
        "n_heads": n_heads,
        "word_emb": nrm((V, H), 0.1),
        "pitch_emb": nrm((n_bins, H), 0.1),
        "energy_emb": nrm((n_bins, H), 0.1),
        "spk_w": nrm((spk_dim, H)),
        "spk_b": jnp.zeros((1, H), jnp.float32),
        "enc": {
            "wqkv": nrm((L, H, 3 * H)),           # fused Q|K|V projection
            "wo": nrm((L, H, H)),                 # fused output projection
            "w1": nrm((L, H, Hff)), "b1": jnp.zeros((L, 1, Hff), jnp.float32),
            "w2": nrm((L, Hff, H)), "b2": jnp.zeros((L, 1, H), jnp.float32),
            "ln1g": jnp.ones((L, 1, H), jnp.float32),
            "ln1b": jnp.zeros((L, 1, H), jnp.float32),
            "ln2g": jnp.ones((L, 1, H), jnp.float32),
            "ln2b": jnp.zeros((L, 1, H), jnp.float32),
        },
    }

    vp = {
        "c1m": nrm((P, H, H)), "c10": nrm((P, H, H)), "c1p": nrm((P, H, H)),
        "cb1": jnp.zeros((P, 1, H), jnp.float32),
        "ln1g": jnp.ones((P, 1, H), jnp.float32),
        "ln1b": jnp.zeros((P, 1, H), jnp.float32),
        "c2m": nrm((P, H, H)), "c20": nrm((P, H, H)), "c2p": nrm((P, H, H)),
        "cb2": jnp.zeros((P, 1, H), jnp.float32),
        "ln2g": jnp.ones((P, 1, H), jnp.float32),
        "ln2b": jnp.zeros((P, 1, H), jnp.float32),
    }
    # pack the three 1-wide linear heads into lane-dense (H, VP_OUT) matrices
    wl = nrm((P, H))
    wl_wide = jnp.zeros((P, H, VP_OUT), jnp.float32)
    for pidx in range(P):
        wl_wide = wl_wide.at[pidx, :, pidx].set(wl[pidx])
    vp["wl"] = wl_wide
    vp["bl"] = jnp.zeros((1, VP_OUT), jnp.float32)
    params["var_pred"] = vp

    params["denoiser"] = {
        "wx": nrm((M, H)), "wc": nrm((H, H)), "wt": nrm((H, H)),
        "b1": jnp.zeros((1, H), jnp.float32),
        "wo": nrm((H, M)), "bo": jnp.zeros((1, M), jnp.float32),
    }
    return params


def get_mask_from_lengths(lengths, max_len):
    ids = jnp.arange(max_len)[None, :]
    return ids >= lengths[:, None]        # True = padded


def sinusoid_table(n_pos, d_hid):
    pos = jnp.arange(n_pos)[:, None].astype(jnp.float32)
    i = jnp.arange(d_hid)[None, :]
    angle = pos / jnp.power(10000.0, (2 * (i // 2)).astype(jnp.float32) / d_hid)
    return jnp.where(i % 2 == 0, jnp.sin(angle), jnp.cos(angle)).astype(jnp.float32)


def specdiffgan_forward(params, key, speakers, texts, src_lens, max_src_len,
                        mels, mel_lens, max_mel_len, p_targets, e_targets,
                        d_targets, mel2phs, spker_embeds,
                        p_control=1.0, e_control=1.0, d_control=1.0,
                        n_diff_steps=4):
    del speakers, d_control   # external speaker embedder path; GT durations used
    H = params["word_emb"].shape[1]
    B = texts.shape[0]

    src_masks = get_mask_from_lengths(src_lens, max_src_len)     # (B, Ts) bool
    mel_masks = get_mask_from_lengths(mel_lens, max_mel_len)     # (B, Tm) bool
    src_pad_f = src_masks.astype(jnp.float32)[:, :, None]
    mel_pad_f = mel_masks.astype(jnp.float32)[:, :, None]

    # ---- FastspeechEncoder: word emb + positional enc + fused FFT stack ----
    x = jnp.take(params["word_emb"], texts, axis=0)              # (B, Ts, H)
    x = x + sinusoid_table(max_src_len, H)[None]
    kv_tile = _pick_tile(max_src_len, 512)
    n_kv = max_src_len // kv_tile
    key_bias = (src_masks.astype(jnp.float32) * (-1e9)).reshape(
        B, n_kv, 1, kv_tile)                                     # lane-major
    x = run_encoder(x, src_pad_f, key_bias, params["enc"],
                    n_layers=params["n_layers"], n_heads=params["n_heads"])

    # ---- speaker embedding (external embedder -> nn.Linear), plain JAX ----
    speaker_emb = spker_embeds @ params["spk_w"] + params["spk_b"]   # (B, H)

    # ---- VarianceAdaptor (fused dur / pitch / energy predictors) ----
    # speaker-embedding add is folded into the kernel.
    log_d_predictions, p_predictions, e_predictions = run_var_predictors(
        x, speaker_emb, src_pad_f, params["var_pred"])

    n_bins = params["pitch_emb"].shape[0]
    pitch_bins = jnp.linspace(-1.0, 1.0, n_bins - 1)
    energy_bins = jnp.linspace(-1.0, 1.0, n_bins - 1)
    p_idx = jnp.searchsorted(pitch_bins, p_targets * p_control)
    e_idx = jnp.searchsorted(energy_bins, e_targets * e_control)

    d_rounded = d_targets     # training path: ground-truth durations
    # length regulator at mel resolution: gather the encoder output and the
    # pitch/energy embedding indices; all adds are folded into the diffusion
    # kernel (no extra (B,T,H) HBM round-trips).
    cond_base = jnp.take_along_axis(x, mel2phs[:, :, None], axis=1)   # (B,Tm,H)
    p_idx_mel = jnp.take_along_axis(p_idx, mel2phs, axis=1)
    e_idx_mel = jnp.take_along_axis(e_idx, mel2phs, axis=1)
    emb_add = (jnp.take(params["pitch_emb"], p_idx_mel, axis=0)
               + jnp.take(params["energy_emb"], e_idx_mel, axis=0))   # (B,Tm,H)

    # ---- GaussianDiffusion (training branch) ----
    betas = jnp.linspace(0.1, 0.4, n_diff_steps).astype(jnp.float32)
    alphas = 1.0 - betas
    ac = jnp.cumprod(alphas)
    kt, kn1, kn2 = jax.random.split(key, 3)
    t = jax.random.randint(kt, (B,), 0, n_diff_steps)
    ac_t = ac[t]
    ac_prev = jnp.where(t == 0, 1.0, ac[jnp.maximum(t - 1, 0)])
    coef = jnp.stack([jnp.sqrt(ac_t), jnp.sqrt(1.0 - ac_t),
                      jnp.sqrt(ac_prev), jnp.sqrt(1.0 - ac_prev),
                      betas[t] * jnp.sqrt(ac_prev) / (1.0 - ac_t),
                      (1.0 - ac_prev) * jnp.sqrt(alphas[t]) / (1.0 - ac_t)],
                     axis=-1).astype(jnp.float32)                # (B, 6)
    noise1 = jax.random.normal(kn1, mels.shape, jnp.float32)
    noise2 = jax.random.normal(kn2, mels.shape, jnp.float32)

    half = H // 2
    freqs = jnp.exp(-jnp.log(10000.0) * jnp.arange(half) / half)
    targs = t[:, None].astype(jnp.float32) * freqs[None, :]
    temb = jnp.concatenate([jnp.sin(targs), jnp.cos(targs)],
                           axis=-1).astype(jnp.float32)          # (B, H)

    output, x_ts, x_t_prevs, x_t_prev_preds = run_diffusion(
        coef, mels, noise1, noise2, cond_base, emb_add, speaker_emb, temb,
        mel_pad_f, params["denoiser"])

    coarse_mels = None
    return ([output, (x_ts, x_t_prevs, x_t_prev_preds), speaker_emb, t,
             p_predictions, e_predictions, log_d_predictions, d_rounded,
             src_masks, mel_masks, src_lens, mel_lens],
            p_targets, coarse_mels)


# --------------------------------------------------------------------------
if __name__ == "__main__":
    B, V, Ts, Tm, H, Hff, M, SPK, NB = 2, 10, 8, 16, 32, 64, 16, 16, 8

    root = jax.random.PRNGKey(0)
    k_par, k_in, k_diff = jax.random.split(root, 3)
    params = init_params(k_par, V, H, Hff, M, SPK, NB)

    ks = jax.random.split(k_in, 6)
    speakers = jnp.zeros((B,), jnp.int32)
    texts = jax.random.randint(ks[0], (B, Ts), 1, V)
    src_lens = jnp.array([Ts, Ts - 2], jnp.int32)
    mel_lens = jnp.array([Tm, Tm - 4], jnp.int32)
    mels = jax.random.uniform(ks[1], (B, Tm, M), jnp.float32, -1.0, 1.0)
    p_targets = jax.random.normal(ks[2], (B, Ts), jnp.float32)
    e_targets = jax.random.normal(ks[3], (B, Ts), jnp.float32)
    d_targets = jnp.full((B, Ts), 2, jnp.int32)
    mel2phs = jnp.tile(jnp.clip(jnp.arange(Tm)[None, :] // 2, 0, Ts - 1)
                       .astype(jnp.int32), (B, 1))
    spker_embeds = jax.random.normal(ks[4], (B, SPK), jnp.float32)

    out = specdiffgan_forward(params, k_diff, speakers, texts, src_lens, Ts,
                              mels, mel_lens, Tm, p_targets, e_targets,
                              d_targets, mel2phs, spker_embeds)
    jax.block_until_ready(out)
    print("KERNEL_OK")
</pallas_src>

<mosaic_0001>
module attributes {stable_mosaic.version = 11 : i64} {
  func.func @_k(%arg0: i32, %arg1: memref<8x128xf32, #tpu.memory_space<vmem>>, %arg2: memref<8x128xf32, #tpu.memory_space<vmem>>, %arg3: memref<8x128xf32, #tpu.memory_space<vmem>>, %arg4: memref<8x128xf32, #tpu.memory_space<vmem>>) attributes {dimension_semantics = [#tpu.dimension_semantics<arbitrary>], iteration_bounds = array<i64: 2>, scalar_prefetch = 0 : i64, scratch_operands = 1 : i64, tpu.core_type = #tpu.core_type<tc>, window_params = [{transform_indices = @transform_0, window_bounds = array<i64: 8, 128>}, {pipeline_mode = #tpu.pipeline_mode<synchronous>, transform_indices = @transform_1, window_bounds = array<i64: 8, 128>}, {transform_indices = @transform_2, window_bounds = array<i64: 8, 128>}]} {
    %c0 = arith.constant 0 : index
    %c0_0 = arith.constant 0 : index
    %0 = vector.load %arg1[%c0, %c0_0] : memref<8x128xf32, #tpu.memory_space<vmem>>, vector<8x128xf32>
    %c0_1 = arith.constant 0 : index
    %c0_2 = arith.constant 0 : index
    %1 = vector.load %arg2[%c0_1, %c0_2] : memref<8x128xf32, #tpu.memory_space<vmem>>, vector<8x128xf32>
    %2 = arith.addf %0, %1 : vector<8x128xf32>
    %c0_3 = arith.constant 0 : index
    %c0_4 = arith.constant 0 : index
    %3 = vector.load %arg4[%c0_3, %c0_4] : memref<8x128xf32, #tpu.memory_space<vmem>>, vector<8x128xf32>
    tpu.vector_store %arg4[%c0_3, %c0_4], %2 {strides = array<i32>} : memref<8x128xf32, #tpu.memory_space<vmem>>, vector<8x128xf32>,
    %c0_5 = arith.constant 0 : index
    %c0_6 = arith.constant 0 : index
    %4 = vector.load %arg4[%c0_5, %c0_6] : memref<8x128xf32, #tpu.memory_space<vmem>>, vector<8x128xf32>
    %c0_7 = arith.constant 0 : index
    %c0_8 = arith.constant 0 : index
    %5 = vector.load %arg3[%c0_7, %c0_8] : memref<8x128xf32, #tpu.memory_space<vmem>>, vector<8x128xf32>
    tpu.vector_store %arg3[%c0_7, %c0_8], %4 {strides = array<i32>} : memref<8x128xf32, #tpu.memory_space<vmem>>, vector<8x128xf32>,
    return
  }
  func.func @transform_0(%arg0: i32) -> (i32, i32) {
    %c0_i32 = arith.constant 0 : i32
    %c0_i32_0 = arith.constant 0 : i32
    return %arg0, %c0_i32 : i32, i32
  }
  func.func @transform_1(%arg0: i32) -> (i32, i32) {
    %c0_i32 = arith.constant 0 : i32
    %c0_i32_0 = arith.constant 0 : i32
    %c0_i32_1 = arith.constant 0 : i32
    return %c0_i32, %c0_i32_0 : i32, i32
  }
  func.func @transform_2(%arg0: i32) -> (i32, i32) {
    %c0_i32 = arith.constant 0 : i32
    %c0_i32_0 = arith.constant 0 : i32
    return %arg0, %c0_i32 : i32, i32
  }
}

module attributes {stable_mosaic.version = 11 : i64} {
  func.func @encoder_kernel(%arg0: i32, %arg1: memref<1x8x32xf32, #tpu.memory_space<vmem>>, %arg2: memref<1x8x1xf32, #tpu.memory_space<vmem>>, %arg3: memref<1x1x1x8xf32, #tpu.memory_space<vmem>>, %arg4: memref<2x32x96xbf16, #tpu.memory_space<vmem>>, %arg5: memref<2x32x32xbf16, #tpu.memory_space<vmem>>, %arg6: memref<2x32x64xbf16, #tpu.memory_space<vmem>>, %arg7: memref<2x1x64xf32, #tpu.memory_space<vmem>>, %arg8: memref<2x64x32xbf16, #tpu.memory_space<vmem>>, %arg9: memref<2x1x32xf32, #tpu.memory_space<vmem>>, %arg10: memref<2x1x32xf32, #tpu.memory_space<vmem>>, %arg11: memref<2x1x32xf32, #tpu.memory_space<vmem>>, %arg12: memref<2x1x32xf32, #tpu.memory_space<vmem>>, %arg13: memref<2x1x32xf32, #tpu.memory_space<vmem>>, %arg14: memref<1x8x32xf32, #tpu.memory_space<vmem>>, %arg15: memref<8x96xbf16, #tpu.memory_space<vmem>>, %arg16: memref<8x32xbf16, #tpu.memory_space<vmem>>) attributes {dimension_semantics = [#tpu.dimension_semantics<parallel>], iteration_bounds = array<i64: 2>, scalar_prefetch = 0 : i64, scratch_operands = 2 : i64, tpu.core_type = #tpu.core_type<tc>, window_params = [{transform_indices = @transform_0, window_bounds = array<i64: 1, 8, 32>}, {transform_indices = @transform_1, window_bounds = array<i64: 1, 8, 1>}, {transform_indices = @transform_2, window_bounds = array<i64: 1, 1, 1, 8>}, {pipeline_mode = #tpu.pipeline_mode<synchronous>, transform_indices = @transform_3, window_bounds = array<i64: 2, 32, 96>}, {pipeline_mode = #tpu.pipeline_mode<synchronous>, transform_indices = @transform_4, window_bounds = array<i64: 2, 32, 32>}, {pipeline_mode = #tpu.pipeline_mode<synchronous>, transform_indices = @transform_5, window_bounds = array<i64: 2, 32, 64>}, {pipeline_mode = #tpu.pipeline_mode<synchronous>, transform_indices = @transform_6, window_bounds = array<i64: 2, 1, 64>}, {pipeline_mode = #tpu.pipeline_mode<synchronous>, transform_indices = @transform_7, window_bounds = array<i64: 2, 64, 32>}, {pipeline_mode = #tpu.pipeline_mode<synchronous>, transform_indices = @transform_8, window_bounds = array<i64: 2, 1, 32>}, {pipeline_mode = #tpu.pipeline_mode<synchronous>, transform_indices = @transform_9, window_bounds = array<i64: 2, 1, 32>}, {pipeline_mode = #tpu.pipeline_mode<synchronous>, transform_indices = @transform_10, window_bounds = array<i64: 2, 1, 32>}, {pipeline_mode = #tpu.pipeline_mode<synchronous>, transform_indices = @transform_11, window_bounds = array<i64: 2, 1, 32>}, {pipeline_mode = #tpu.pipeline_mode<synchronous>, transform_indices = @transform_12, window_bounds = array<i64: 2, 1, 32>}, {transform_indices = @transform_13, window_bounds = array<i64: 1, 8, 32>}]} {
    %c0 = arith.constant 0 : index
    %c0_0 = arith.constant 0 : index
    %c0_1 = arith.constant 0 : index
    %0 = vector.load %arg2[%c0, %c0_0, %c0_1] : memref<1x8x1xf32, #tpu.memory_space<vmem>>, vector<1x8x1xf32>
    %1 = vector.shape_cast %0 : vector<1x8x1xf32> to vector<8x1xf32>
    %cst = arith.constant 1.000000e+00 : f32
    %2 = vector.broadcast %cst : f32 to vector<8x1xf32>
    %3 = arith.subf %2, %1 : vector<8x1xf32>
    %c0_2 = arith.constant 0 : index
    %c0_3 = arith.constant 0 : index
    %c0_4 = arith.constant 0 : index
    %4 = vector.load %arg1[%c0_2, %c0_3, %c0_4] : memref<1x8x32xf32, #tpu.memory_space<vmem>>, vector<1x8x32xf32>
    %5 = vector.shape_cast %4 : vector<1x8x32xf32> to vector<8x32xf32>
    %c0_i32 = arith.constant 0 : i32
    %c2_i32 = arith.constant 2 : i32
    %6 = arith.addi %c0_i32, %c2_i32 : i32
    %c1_i32 = arith.constant 1 : i32
    %7 = scf.for %arg17 = %c0_i32 to %6 step %c1_i32 iter_args(%arg18 = %5) -> (vector<8x32xf32>)  : i32 {
      %11 = arith.truncf %arg18 : vector<8x32xf32> to vector<8x32xbf16>
      %12 = arith.index_cast %arg17 : i32 to index
      %c0_9 = arith.constant 0 : index
      %c0_10 = arith.constant 0 : index
      %13 = vector.load %arg4[%12, %c0_9, %c0_10] : memref<2x32x96xbf16, #tpu.memory_space<vmem>>, vector<1x32x96xbf16>
      %14 = vector.shape_cast %13 : vector<1x32x96xbf16> to vector<32x96xbf16>
      %cst_11 = arith.constant dense<0.000000e+00> : vector<8x96xf32>
      %15 = tpu.matmul %11, %14, %cst_11 {dimension_numbers = #tpu.dot_dimension_numbers<[1], [0], [0], [1], [0, 0, 1, 1], [], []>} : vector<8x32xbf16>, vector<32x96xbf16>, vector<8x96xf32> -> vector<8x96xf32>
      %16 = arith.truncf %15 : vector<8x96xf32> to vector<8x96xbf16>
      %c0_12 = arith.constant 0 : index
      %c0_13 = arith.constant 0 : index
      %17 = vector.load %arg15[%c0_12, %c0_13] : memref<8x96xbf16, #tpu.memory_space<vmem>>, vector<8x96xbf16>
      tpu.vector_store %arg15[%c0_12, %c0_13], %16 {strides = array<i32>} : memref<8x96xbf16, #tpu.memory_space<vmem>>, vector<8x96xbf16>,
      %c0_14 = arith.constant 0 : index
      %c0_15 = arith.constant 0 : index
      %18 = vector.load %arg15[%c0_14, %c0_15] : memref<8x96xbf16, #tpu.memory_space<vmem>>, vector<8x16xbf16>
      %cst_16 = arith.constant -1.000000e+30 : f32
      %19 = vector.broadcast %cst_16 : f32 to vector<8x1xf32>
      %cst_17 = arith.constant 0.000000e+00 : f32
      %20 = vector.broadcast %cst_17 : f32 to vector<8x1xf32>
      %cst_18 = arith.constant 0.000000e+00 : f32
      %21 = vector.broadcast %cst_18 : f32 to vector<8x16xf32>
      %c0_i32_19 = arith.constant 0 : i32
      %c8_i32 = arith.constant 8 : i32
      %22 = arith.muli %c0_i32_19, %c8_i32 : i32
      %23 = tpu.assume_multiple %22, 8 : i32
      %24 = arith.index_cast %23 : i32 to index
      %c32 = arith.constant 32 : index
      %25 = vector.load %arg15[%24, %c32] : memref<8x96xbf16, #tpu.memory_space<vmem>>, vector<8x16xbf16>
      %26 = arith.index_cast %23 : i32 to index
      %c64 = arith.constant 64 : index
      %27 = vector.load %arg15[%26, %c64] : memref<8x96xbf16, #tpu.memory_space<vmem>>, vector<8x16xbf16>
      %cst_20 = arith.constant dense<0.000000e+00> : vector<8x8xf32>
      %28 = tpu.matmul %18, %25, %cst_20 {dimension_numbers = #tpu.dot_dimension_numbers<[1], [1], [0], [0], [0, 0, 1, 0], [], []>} : vector<8x16xbf16>, vector<8x16xbf16>, vector<8x8xf32> -> vector<8x8xf32>
      %c0_21 = arith.constant 0 : index
      %29 = arith.index_cast %c0_i32_19 : i32 to index
      %c0_22 = arith.constant 0 : index
      %c0_23 = arith.constant 0 : index
      %30 = vector.load %arg3[%c0_21, %29, %c0_22, %c0_23] : memref<1x1x1x8xf32, #tpu.memory_space<vmem>>, vector<1x1x1x8xf32>
      %31 = vector.shape_cast %30 : vector<1x1x1x8xf32> to vector<1x8xf32>
      %32 = vector.broadcast %31 : vector<1x8xf32> to vector<8x8xf32>
      %33 = arith.addf %28, %32 : vector<8x8xf32>
      %cst_24 = arith.constant dense<0xFF800000> : vector<8xf32>
      %34 = vector.multi_reduction <maximumf>, %33, %cst_24 [1] : vector<8x8xf32> to vector<8xf32>
      %35 = vector.shape_cast %34 : vector<8xf32> to vector<8x1xf32>
      %36 = arith.maximumf %19, %35 : vector<8x1xf32>
      %37 = arith.subf %19, %36 : vector<8x1xf32>
      %38 = math.exp %37 : vector<8x1xf32>
      %39 = vector.broadcast %36 : vector<8x1xf32> to vector<8x8xf32>
      %40 = arith.subf %33, %39 : vector<8x8xf32>
      %41 = math.exp %40 : vector<8x8xf32>
      %42 = arith.mulf %38, %20 : vector<8x1xf32>
      %cst_25 = arith.constant dense<0.000000e+00> : vector<8xf32>
      %43 = vector.multi_reduction <add>, %41, %cst_25 [1] : vector<8x8xf32> to vector<8xf32>
      %44 = vector.shape_cast %43 : vector<8xf32> to vector<8x1xf32>
      %45 = arith.addf %42, %44 : vector<8x1xf32>
      %46 = vector.broadcast %38 : vector<8x1xf32> to vector<8x16xf32>
      %47 = arith.mulf %46, %21 : vector<8x16xf32>
      %48 = arith.truncf %41 : vector<8x8xf32> to vector<8x8xbf16>
      %cst_26 = arith.constant dense<0.000000e+00> : vector<8x16xf32>
      %49 = tpu.matmul %48, %27, %cst_26 {dimension_numbers = #tpu.dot_dimension_numbers<[1], [0], [0], [1], [0, 0, 1, 1], [], []>} : vector<8x8xbf16>, vector<8x16xbf16>, vector<8x16xf32> -> vector<8x16xf32>
      %50 = arith.addf %47, %49 : vector<8x16xf32>
      %c1_i32_27 = arith.constant 1 : i32
      %51 = tpu.reciprocal %45 {approx = true} : vector<8x1xf32> -> vector<8x1xf32>
      %52 = vector.broadcast %51 : vector<8x1xf32> to vector<8x16xf32>
      %53 = arith.mulf %50, %52 : vector<8x16xf32>
      %54 = arith.truncf %53 : vector<8x16xf32> to vector<8x16xbf16>
      %c0_28 = arith.constant 0 : index
      %c0_29 = arith.constant 0 : index
      %55 = vector.load %arg16[%c0_28, %c0_29] : memref<8x32xbf16, #tpu.memory_space<vmem>>, vector<8x16xbf16>
      tpu.vector_store %arg16[%c0_28, %c0_29], %54 {strides = array<i32>} : memref<8x32xbf16, #tpu.memory_space<vmem>>, vector<8x16xbf16>,
      %c0_30 = arith.constant 0 : index
      %c16 = arith.constant 16 : index
      %56 = vector.load %arg15[%c0_30, %c16] : memref<8x96xbf16, #tpu.memory_space<vmem>>, vector<8x16xbf16>
      %cst_31 = arith.constant -1.000000e+30 : f32
      %57 = vector.broadcast %cst_31 : f32 to vector<8x1xf32>
      %cst_32 = arith.constant 0.000000e+00 : f32
      %58 = vector.broadcast %cst_32 : f32 to vector<8x1xf32>
      %cst_33 = arith.constant 0.000000e+00 : f32
      %59 = vector.broadcast %cst_33 : f32 to vector<8x16xf32>
      %c0_i32_34 = arith.constant 0 : i32
      %c8_i32_35 = arith.constant 8 : i32
      %60 = arith.muli %c0_i32_34, %c8_i32_35 : i32
      %61 = tpu.assume_multiple %60, 8 : i32
      %62 = arith.index_cast %61 : i32 to index
      %c48 = arith.constant 48 : index
      %63 = vector.load %arg15[%62, %c48] : memref<8x96xbf16, #tpu.memory_space<vmem>>, vector<8x16xbf16>
      %64 = arith.index_cast %61 : i32 to index
      %c80 = arith.constant 80 : index
      %65 = vector.load %arg15[%64, %c80] : memref<8x96xbf16, #tpu.memory_space<vmem>>, vector<8x16xbf16>
      %cst_36 = arith.constant dense<0.000000e+00> : vector<8x8xf32>
      %66 = tpu.matmul %56, %63, %cst_36 {dimension_numbers = #tpu.dot_dimension_numbers<[1], [1], [0], [0], [0, 0, 1, 0], [], []>} : vector<8x16xbf16>, vector<8x16xbf16>, vector<8x8xf32> -> vector<8x8xf32>
      %c0_37 = arith.constant 0 : index
      %67 = arith.index_cast %c0_i32_34 : i32 to index
      %c0_38 = arith.constant 0 : index
      %c0_39 = arith.constant 0 : index
      %68 = vector.load %arg3[%c0_37, %67, %c0_38, %c0_39] : memref<1x1x1x8xf32, #tpu.memory_space<vmem>>, vector<1x1x1x8xf32>
      %69 = vector.shape_cast %68 : vector<1x1x1x8xf32> to vector<1x8xf32>
      %70 = vector.broadcast %69 : vector<1x8xf32> to vector<8x8xf32>
      %71 = arith.addf %66, %70 : vector<8x8xf32>
      %cst_40 = arith.constant dense<0xFF800000> : vector<8xf32>
      %72 = vector.multi_reduction <maximumf>, %71, %cst_40 [1] : vector<8x8xf32> to vector<8xf32>
      %73 = vector.shape_cast %72 : vector<8xf32> to vector<8x1xf32>
      %74 = arith.maximumf %57, %73 : vector<8x1xf32>
      %75 = arith.subf %57, %74 : vector<8x1xf32>
      %76 = math.exp %75 : vector<8x1xf32>
      %77 = vector.broadcast %74 : vector<8x1xf32> to vector<8x8xf32>
      %78 = arith.subf %71, %77 : vector<8x8xf32>
      %79 = math.exp %78 : vector<8x8xf32>
      %80 = arith.mulf %76, %58 : vector<8x1xf32>
      %cst_41 = arith.constant dense<0.000000e+00> : vector<8xf32>
      %81 = vector.multi_reduction <add>, %79, %cst_41 [1] : vector<8x8xf32> to vector<8xf32>
      %82 = vector.shape_cast %81 : vector<8xf32> to vector<8x1xf32>
      %83 = arith.addf %80, %82 : vector<8x1xf32>
      %84 = vector.broadcast %76 : vector<8x1xf32> to vector<8x16xf32>
      %85 = arith.mulf %84, %59 : vector<8x16xf32>
      %86 = arith.truncf %79 : vector<8x8xf32> to vector<8x8xbf16>
      %cst_42 = arith.constant dense<0.000000e+00> : vector<8x16xf32>
      %87 = tpu.matmul %86, %65, %cst_42 {dimension_numbers = #tpu.dot_dimension_numbers<[1], [0], [0], [1], [0, 0, 1, 1], [], []>} : vector<8x8xbf16>, vector<8x16xbf16>, vector<8x16xf32> -> vector<8x16xf32>
      %88 = arith.addf %85, %87 : vector<8x16xf32>
      %c1_i32_43 = arith.constant 1 : i32
      %89 = tpu.reciprocal %83 {approx = true} : vector<8x1xf32> -> vector<8x1xf32>
      %90 = vector.broadcast %89 : vector<8x1xf32> to vector<8x16xf32>
      %91 = arith.mulf %88, %90 : vector<8x16xf32>
      %92 = arith.truncf %91 : vector<8x16xf32> to vector<8x16xbf16>
      %c0_44 = arith.constant 0 : index
      %c16_45 = arith.constant 16 : index
      %93 = vector.load %arg16[%c0_44, %c16_45] : memref<8x32xbf16, #tpu.memory_space<vmem>>, vector<8x16xbf16>
      tpu.vector_store %arg16[%c0_44, %c16_45], %92 {strides = array<i32>} : memref<8x32xbf16, #tpu.memory_space<vmem>>, vector<8x16xbf16>,
      %c0_46 = arith.constant 0 : index
      %c0_47 = arith.constant 0 : index
      %94 = vector.load %arg16[%c0_46, %c0_47] : memref<8x32xbf16, #tpu.memory_space<vmem>>, vector<8x32xbf16>
      %95 = arith.index_cast %arg17 : i32 to index
      %c0_48 = arith.constant 0 : index
      %c0_49 = arith.constant 0 : index
      %96 = vector.load %arg5[%95, %c0_48, %c0_49] : memref<2x32x32xbf16, #tpu.memory_space<vmem>>, vector<1x32x32xbf16>
      %97 = vector.shape_cast %96 : vector<1x32x32xbf16> to vector<32x32xbf16>
      %cst_50 = arith.constant dense<0.000000e+00> : vector<8x32xf32>
      %98 = tpu.matmul %94, %97, %cst_50 {dimension_numbers = #tpu.dot_dimension_numbers<[1], [0], [0], [1], [0, 0, 1, 1], [], []>} : vector<8x32xbf16>, vector<32x32xbf16>, vector<8x32xf32> -> vector<8x32xf32>
      %99 = arith.addf %arg18, %98 : vector<8x32xf32>
      %100 = arith.index_cast %arg17 : i32 to index
      %c0_51 = arith.constant 0 : index
      %c0_52 = arith.constant 0 : index
      %101 = vector.load %arg10[%100, %c0_51, %c0_52] : memref<2x1x32xf32, #tpu.memory_space<vmem>>, vector<1x1x32xf32>
      %102 = vector.shape_cast %101 : vector<1x1x32xf32> to vector<1x32xf32>
      %103 = arith.index_cast %arg17 : i32 to index
      %c0_53 = arith.constant 0 : index
      %c0_54 = arith.constant 0 : index
      %104 = vector.load %arg11[%103, %c0_53, %c0_54] : memref<2x1x32xf32, #tpu.memory_space<vmem>>, vector<1x1x32xf32>
      %105 = vector.shape_cast %104 : vector<1x1x32xf32> to vector<1x32xf32>
      %cst_55 = arith.constant dense<0.000000e+00> : vector<8xf32>
      %106 = vector.multi_reduction <add>, %99, %cst_55 [1] : vector<8x32xf32> to vector<8xf32>
      %107 = vector.shape_cast %106 : vector<8xf32> to vector<8x1xf32>
      %cst_56 = arith.constant 3.200000e+01 : f32
      %108 = vector.broadcast %cst_56 : f32 to vector<8x1xf32>
      %109 = arith.divf %107, %108 : vector<8x1xf32>
      %110 = vector.broadcast %109 : vector<8x1xf32> to vector<8x32xf32>
      %111 = arith.subf %99, %110 : vector<8x32xf32>
      %112 = arith.mulf %111, %111 : vector<8x32xf32>
      %cst_57 = arith.constant dense<0.000000e+00> : vector<8xf32>
      %113 = vector.multi_reduction <add>, %112, %cst_57 [1] : vector<8x32xf32> to vector<8xf32>
      %114 = vector.shape_cast %113 : vector<8xf32> to vector<8x1xf32>
      %cst_58 = arith.constant 3.200000e+01 : f32
      %115 = vector.broadcast %cst_58 : f32 to vector<8x1xf32>
      %116 = arith.divf %114, %115 : vector<8x1xf32>
      %117 = vector.broadcast %109 : vector<8x1xf32> to vector<8x32xf32>
      %118 = arith.subf %99, %117 : vector<8x32xf32>
      %cst_59 = arith.constant 9.99999974E-6 : f32
      %119 = vector.broadcast %cst_59 : f32 to vector<8x1xf32>
      %120 = arith.addf %116, %119 : vector<8x1xf32>
      %121 = math.rsqrt %120 : vector<8x1xf32>
      %122 = vector.broadcast %121 : vector<8x1xf32> to vector<8x32xf32>
      %123 = arith.mulf %118, %122 : vector<8x32xf32>
      %124 = vector.broadcast %102 : vector<1x32xf32> to vector<8x32xf32>
      %125 = arith.mulf %123, %124 : vector<8x32xf32>
      %126 = vector.broadcast %105 : vector<1x32xf32> to vector<8x32xf32>
      %127 = arith.addf %125, %126 : vector<8x32xf32>
      %128 = vector.broadcast %3 : vector<8x1xf32> to vector<8x32xf32>
      %129 = arith.mulf %127, %128 : vector<8x32xf32>
      %130 = arith.truncf %129 : vector<8x32xf32> to vector<8x32xbf16>
      %131 = arith.index_cast %arg17 : i32 to index
      %c0_60 = arith.constant 0 : index
      %c0_61 = arith.constant 0 : index
      %132 = vector.load %arg6[%131, %c0_60, %c0_61] : memref<2x32x64xbf16, #tpu.memory_space<vmem>>, vector<1x32x64xbf16>
      %133 = vector.shape_cast %132 : vector<1x32x64xbf16> to vector<32x64xbf16>
      %cst_62 = arith.constant dense<0.000000e+00> : vector<8x64xf32>
      %134 = tpu.matmul %130, %133, %cst_62 {dimension_numbers = #tpu.dot_dimension_numbers<[1], [0], [0], [1], [0, 0, 1, 1], [], []>} : vector<8x32xbf16>, vector<32x64xbf16>, vector<8x64xf32> -> vector<8x64xf32>
      %135 = arith.index_cast %arg17 : i32 to index
      %c0_63 = arith.constant 0 : index
      %c0_64 = arith.constant 0 : index
      %136 = vector.load %arg7[%135, %c0_63, %c0_64] : memref<2x1x64xf32, #tpu.memory_space<vmem>>, vector<1x1x64xf32>
      %137 = vector.shape_cast %136 : vector<1x1x64xf32> to vector<1x64xf32>
      %138 = vector.broadcast %137 : vector<1x64xf32> to vector<8x64xf32>
      %139 = arith.addf %134, %138 : vector<8x64xf32>
      %cst_65 = arith.constant 0.000000e+00 : f32
      %140 = vector.broadcast %cst_65 : f32 to vector<8x64xf32>
      %141 = arith.maximumf %139, %140 : vector<8x64xf32>
      %142 = arith.truncf %141 : vector<8x64xf32> to vector<8x64xbf16>
      %143 = arith.index_cast %arg17 : i32 to index
      %c0_66 = arith.constant 0 : index
      %c0_67 = arith.constant 0 : index
      %144 = vector.load %arg8[%143, %c0_66, %c0_67] : memref<2x64x32xbf16, #tpu.memory_space<vmem>>, vector<1x64x32xbf16>
      %145 = vector.shape_cast %144 : vector<1x64x32xbf16> to vector<64x32xbf16>
      %cst_68 = arith.constant dense<0.000000e+00> : vector<8x32xf32>
      %146 = tpu.matmul %142, %145, %cst_68 {dimension_numbers = #tpu.dot_dimension_numbers<[1], [0], [0], [1], [0, 0, 1, 1], [], []>} : vector<8x64xbf16>, vector<64x32xbf16>, vector<8x32xf32> -> vector<8x32xf32>
      %147 = arith.index_cast %arg17 : i32 to index
      %c0_69 = arith.constant 0 : index
      %c0_70 = arith.constant 0 : index
      %148 = vector.load %arg9[%147, %c0_69, %c0_70] : memref<2x1x32xf32, #tpu.memory_space<vmem>>, vector<1x1x32xf32>
      %149 = vector.shape_cast %148 : vector<1x1x32xf32> to vector<1x32xf32>
      %150 = vector.broadcast %149 : vector<1x32xf32> to vector<8x32xf32>
      %151 = arith.addf %146, %150 : vector<8x32xf32>
      %152 = arith.addf %129, %151 : vector<8x32xf32>
      %153 = arith.index_cast %arg17 : i32 to index
      %c0_71 = arith.constant 0 : index
      %c0_72 = arith.constant 0 : index
      %154 = vector.load %arg12[%153, %c0_71, %c0_72] : memref<2x1x32xf32, #tpu.memory_space<vmem>>, vector<1x1x32xf32>
      %155 = vector.shape_cast %154 : vector<1x1x32xf32> to vector<1x32xf32>
      %156 = arith.index_cast %arg17 : i32 to index
      %c0_73 = arith.constant 0 : index
      %c0_74 = arith.constant 0 : index
      %157 = vector.load %arg13[%156, %c0_73, %c0_74] : memref<2x1x32xf32, #tpu.memory_space<vmem>>, vector<1x1x32xf32>
      %158 = vector.shape_cast %157 : vector<1x1x32xf32> to vector<1x32xf32>
      %cst_75 = arith.constant dense<0.000000e+00> : vector<8xf32>
      %159 = vector.multi_reduction <add>, %152, %cst_75 [1] : vector<8x32xf32> to vector<8xf32>
      %160 = vector.shape_cast %159 : vector<8xf32> to vector<8x1xf32>
      %cst_76 = arith.constant 3.200000e+01 : f32
      %161 = vector.broadcast %cst_76 : f32 to vector<8x1xf32>
      %162 = arith.divf %160, %161 : vector<8x1xf32>
      %163 = vector.broadcast %162 : vector<8x1xf32> to vector<8x32xf32>
      %164 = arith.subf %152, %163 : vector<8x32xf32>
      %165 = arith.mulf %164, %164 : vector<8x32xf32>
      %cst_77 = arith.constant dense<0.000000e+00> : vector<8xf32>
      %166 = vector.multi_reduction <add>, %165, %cst_77 [1] : vector<8x32xf32> to vector<8xf32>
      %167 = vector.shape_cast %166 : vector<8xf32> to vector<8x1xf32>
      %cst_78 = arith.constant 3.200000e+01 : f32
      %168 = vector.broadcast %cst_78 : f32 to vector<8x1xf32>
      %169 = arith.divf %167, %168 : vector<8x1xf32>
      %170 = vector.broadcast %162 : vector<8x1xf32> to vector<8x32xf32>
      %171 = arith.subf %152, %170 : vector<8x32xf32>
      %cst_79 = arith.constant 9.99999974E-6 : f32
      %172 = vector.broadcast %cst_79 : f32 to vector<8x1xf32>
      %173 = arith.addf %169, %172 : vector<8x1xf32>
      %174 = math.rsqrt %173 : vector<8x1xf32>
      %175 = vector.broadcast %174 : vector<8x1xf32> to vector<8x32xf32>
      %176 = arith.mulf %171, %175 : vector<8x32xf32>
      %177 = vector.broadcast %155 : vector<1x32xf32> to vector<8x32xf32>
      %178 = arith.mulf %176, %177 : vector<8x32xf32>
      %179 = vector.broadcast %158 : vector<1x32xf32> to vector<8x32xf32>
      %180 = arith.addf %178, %179 : vector<8x32xf32>
      %181 = vector.broadcast %3 : vector<8x1xf32> to vector<8x32xf32>
      %182 = arith.mulf %180, %181 : vector<8x32xf32>
      scf.yield %182 : vector<8x32xf32>
    }
    %c2_i32_5 = arith.constant 2 : i32
    %c0_6 = arith.constant 0 : index
    %c0_7 = arith.constant 0 : index
    %c0_8 = arith.constant 0 : index
    %8 = vector.load %arg14[%c0_6, %c0_7, %c0_8] : memref<1x8x32xf32, #tpu.memory_space<vmem>>, vector<1x8x32xf32>
    %9 = vector.shape_cast %8 : vector<1x8x32xf32> to vector<8x32xf32>
    %10 = vector.shape_cast %7 : vector<8x32xf32> to vector<1x8x32xf32>
    tpu.vector_store %arg14[%c0_6, %c0_7, %c0_8], %10 {strides = array<i32>} : memref<1x8x32xf32, #tpu.memory_space<vmem>>, vector<1x8x32xf32>,
    return
  }
  func.func @transform_0(%arg0: i32) -> (i32, i32, i32) {
    %c0_i32 = arith.constant 0 : i32
    %c0_i32_0 = arith.constant 0 : i32
    %c0_i32_1 = arith.constant 0 : i32
    return %arg0, %c0_i32, %c0_i32_0 : i32, i32, i32
  }
  func.func @transform_1(%arg0: i32) -> (i32, i32, i32) {
    %c0_i32 = arith.constant 0 : i32
    %c0_i32_0 = arith.constant 0 : i32
    %c0_i32_1 = arith.constant 0 : i32
    return %arg0, %c0_i32, %c0_i32_0 : i32, i32, i32
  }
  func.func @transform_2(%arg0: i32) -> (i32, i32, i32, i32) {
    %c0_i32 = arith.constant 0 : i32
    %c0_i32_0 = arith.constant 0 : i32
    %c0_i32_1 = arith.constant 0 : i32
    %c0_i32_2 = arith.constant 0 : i32
    return %arg0, %c0_i32, %c0_i32_0, %c0_i32_1 : i32, i32, i32, i32
  }
  func.func @transform_3(%arg0: i32) -> (i32, i32, i32) {
    %c0_i32 = arith.constant 0 : i32
    %c0_i32_0 = arith.constant 0 : i32
    %c0_i32_1 = arith.constant 0 : i32
    %c0_i32_2 = arith.constant 0 : i32
    return %c0_i32, %c0_i32_0, %c0_i32_1 : i32, i32, i32
  }
  func.func @transform_4(%arg0: i32) -> (i32, i32, i32) {
    %c0_i32 = arith.constant 0 : i32
    %c0_i32_0 = arith.constant 0 : i32
    %c0_i32_1 = arith.constant 0 : i32
    %c0_i32_2 = arith.constant 0 : i32
    return %c0_i32, %c0_i32_0, %c0_i32_1 : i32, i32, i32
  }
  func.func @transform_5(%arg0: i32) -> (i32, i32, i32) {
    %c0_i32 = arith.constant 0 : i32
    %c0_i32_0 = arith.constant 0 : i32
    %c0_i32_1 = arith.constant 0 : i32
    %c0_i32_2 = arith.constant 0 : i32
    return %c0_i32, %c0_i32_0, %c0_i32_1 : i32, i32, i32
  }
  func.func @transform_6(%arg0: i32) -> (i32, i32, i32) {
    %c0_i32 = arith.constant 0 : i32
    %c0_i32_0 = arith.constant 0 : i32
    %c0_i32_1 = arith.constant 0 : i32
    %c0_i32_2 = arith.constant 0 : i32
    return %c0_i32, %c0_i32_0, %c0_i32_1 : i32, i32, i32
  }
  func.func @transform_7(%arg0: i32) -> (i32, i32, i32) {
    %c0_i32 = arith.constant 0 : i32
    %c0_i32_0 = arith.constant 0 : i32
    %c0_i32_1 = arith.constant 0 : i32
    %c0_i32_2 = arith.constant 0 : i32
    return %c0_i32, %c0_i32_0, %c0_i32_1 : i32, i32, i32
  }
  func.func @transform_8(%arg0: i32) -> (i32, i32, i32) {
    %c0_i32 = arith.constant 0 : i32
    %c0_i32_0 = arith.constant 0 : i32
    %c0_i32_1 = arith.constant 0 : i32
    %c0_i32_2 = arith.constant 0 : i32
    return %c0_i32, %c0_i32_0, %c0_i32_1 : i32, i32, i32
  }
  func.func @transform_9(%arg0: i32) -> (i32, i32, i32) {
    %c0_i32 = arith.constant 0 : i32
    %c0_i32_0 = arith.constant 0 : i32
    %c0_i32_1 = arith.constant 0 : i32
    %c0_i32_2 = arith.constant 0 : i32
    return %c0_i32, %c0_i32_0, %c0_i32_1 : i32, i32, i32
  }
  func.func @transform_10(%arg0: i32) -> (i32, i32, i32) {
    %c0_i32 = arith.constant 0 : i32
    %c0_i32_0 = arith.constant 0 : i32
    %c0_i32_1 = arith.constant 0 : i32
    %c0_i32_2 = arith.constant 0 : i32
    return %c0_i32, %c0_i32_0, %c0_i32_1 : i32, i32, i32
  }
  func.func @transform_11(%arg0: i32) -> (i32, i32, i32) {
    %c0_i32 = arith.constant 0 : i32
    %c0_i32_0 = arith.constant 0 : i32
    %c0_i32_1 = arith.constant 0 : i32
    %c0_i32_2 = arith.constant 0 : i32
    return %c0_i32, %c0_i32_0, %c0_i32_1 : i32, i32, i32
  }
  func.func @transform_12(%arg0: i32) -> (i32, i32, i32) {
    %c0_i32 = arith.constant 0 : i32
    %c0_i32_0 = arith.constant 0 : i32
    %c0_i32_1 = arith.constant 0 : i32
    %c0_i32_2 = arith.constant 0 : i32
    return %c0_i32, %c0_i32_0, %c0_i32_1 : i32, i32, i32
  }
  func.func @transform_13(%arg0: i32) -> (i32, i32, i32) {
    %c0_i32 = arith.constant 0 : i32
    %c0_i32_0 = arith.constant 0 : i32
    %c0_i32_1 = arith.constant 0 : i32
    return %arg0, %c0_i32, %c0_i32_0 : i32, i32, i32
  }
}

</mosaic_0001>

<llo_original>
// kernel: tpu_custom_call.1
$region0: #{tpu_custom_call.1}
  #allocation0 [shape = 'u32[]', space=smem, size = 0x4, offset = 0x4, fixed_abs, tag = 'smem constant byte address 0x4 - core index']
  #allocation1 [shape = 'u32[144,128]{1,0:T(1,128)}', space=vmem, size = 0x12000, scoped, tag = 'internal scratch']
  #allocation2 [shape = 'f32[8,128]{1,0:T(8,128)}', space=vmem, size = 0x1000, scoped, tag = 'scratch operand']
  %s0 = inlined_call_operand.hbm [shape: f32[16,128], index: 0, kind: input, shape index: {}]
  %s1 = inlined_call_operand.hbm [shape: f32[8,128], index: 1, kind: input, shape index: {}]
  %s2 = inlined_call_operand.hbm [shape: f32[16,128], index: 2, kind: output, shape index: {}]
  %s3 = sld [smem:[#allocation0]]
  $region49: #{tpu_custom_call.1} parent=0
    _
  %s5 = ssub.s32 1, %s3
  %s6 = scalar_select 0, %s5, %s3
  $region1: #{tpu_custom_call.1} parent=0
    #allocation3 [shape = 'u8[8192]{0}', space=vmem, size = 0x2000, scoped, tag = 'input window, operand 0']
    #allocation4 [shape = 's32[2]{0}', space=sflag, size = 0x8, scoped, tag = 'scoped memory for tpu_custom_call.1']
    #allocation5 [shape = 's32[2]{0}', space=sflag, size = 0x8, scoped, tag = 'scoped memory for tpu_custom_call.1']
    #allocation6 [shape = 'u8[4096]{0}', space=vmem, size = 0x1000, scoped, tag = 'input window, operand 1, single buffered']
    #allocation7 [shape = 's32[1]{0}', space=sflag, size = 0x4, scoped, tag = 'scoped memory for tpu_custom_call.1']
    #allocation8 [shape = 'u8[8192]{0}', space=vmem, size = 0x2000, scoped, tag = 'output window, operand 0']
    %7 = vsyncpa [#allocation4], 0
    %s8 = scalar_lea.sflag [#allocation4], 1
    %9 = vsyncpa %s8, 0
    %10 = vsyncpa [#allocation7], 0
    %11 = vsyncpa [#allocation5], 0
    %s12 = scalar_lea.sflag [#allocation5], 1
    %13 = vsyncpa %s12, 0
    loop: start=0, step=1, limit=4
    $region2: #{tpu_custom_call.1} parent=1 // loop_pre_header
      _
    $region3: #{tpu_custom_call.1} parent=1 // loop_header
      %s15 = sphi 0, %s19
      %p16 = scmp.ge.s32.totalorder %s15, 4
      %s25 = sphi 0, %s27
      %s28 = sphi 0, %s25
      %s29 = sphi 0, %s28
      %s45 = sphi 0, %s29
      %s49 = sphi 0, %s49
      %s51 = sphi 0, %s49
      %s52 = sphi 0, %s51
      %s66 = sphi 0, %s52
      %s72 = sphi 0, %s74
      %s75 = sphi 0, %s72
      %s76 = sphi 0, %s75
      %s92 = sphi 0, %s76
    $region4: #{tpu_custom_call.1} parent=1 // loop_header_branch
      %18 = sbr.rel (%p16) target = $region8
    $region5: #{tpu_custom_call.1} parent=1 // loop_body
      %s20 = ssub.s32 %s15, 1
      %s21 = ssub.s32 %s15, 2
      %s22 = sadd.s32 %s15, 1
      %s23 = ssub.s32 %s15, %s22
      %p24 = scmp.eq.s32.totalorder %s23, 0
      %s26 = sadd.s32 %s25, 1
      %s27 = scalar_select %p24, %s25, %s26
      %p30 = pneg %p24
      %p31 = scmp.eq.s32.totalorder %s15, 1
      %p32 = por %p30, %p31
      %p33 = scmp.ne.s32.totalorder %s25, %s28
      %p34 = scmp.eq.s32.totalorder %s15, 0
      %p35 = por %p33, %p34
      %p36 = scmp.ne.s32.totalorder %s25, %s28
      %p37 = scmp.eq.s32.totalorder %s20, 1
      %p38 = por %p36, %p37
      %p39 = scmp.ne.s32.totalorder %s28, %s29
      %p40 = scmp.eq.s32.totalorder %s20, 0
      %p41 = por %p39, %p40
      %p42 = scmp.ne.s32.totalorder %s28, %s29
      %p43 = scmp.eq.s32.totalorder %s21, 1
      %p44 = por %p42, %p43
      %p46 = scmp.ne.s32.totalorder %s29, %s45
      %p47 = scmp.eq.s32.totalorder %s21, 0
      %p48 = por %p46, %p47
      %s50 = sadd.s32 %s49, 1
      %p53 = scmp.eq.s32.totalorder %s15, 1
      %p54 = scmp.ne.s32.totalorder %s49, %s51
      %p55 = scmp.eq.s32.totalorder %s15, 0
      %p56 = por %p54, %p55
      %p57 = scmp.ne.s32.totalorder %s49, %s51
      %p58 = scmp.eq.s32.totalorder %s20, 1
      %p59 = por %p57, %p58
      %p60 = scmp.ne.s32.totalorder %s51, %s52
      %p61 = scmp.eq.s32.totalorder %s20, 0
      %p62 = por %p60, %p61
      %p63 = scmp.ne.s32.totalorder %s51, %s52
      %p64 = scmp.eq.s32.totalorder %s21, 1
      %p65 = por %p63, %p64
      %p67 = scmp.ne.s32.totalorder %s52, %s66
      %p68 = scmp.eq.s32.totalorder %s21, 0
      %p69 = por %p67, %p68
      %s70 = ssub.s32 %s15, %s22
      %p71 = scmp.eq.s32.totalorder %s70, 0
      %s73 = sadd.s32 %s72, 1
      %s74 = scalar_select %p71, %s72, %s73
      %p77 = pneg %p71
      %p78 = scmp.eq.s32.totalorder %s15, 1
      %p79 = por %p77, %p78
      %p80 = scmp.ne.s32.totalorder %s72, %s75
      %p81 = scmp.eq.s32.totalorder %s15, 0
      %p82 = por %p80, %p81
      %p83 = scmp.ne.s32.totalorder %s72, %s75
      %p84 = scmp.eq.s32.totalorder %s20, 1
      %p85 = por %p83, %p84
      %p86 = scmp.ne.s32.totalorder %s75, %s76
      %p87 = scmp.eq.s32.totalorder %s20, 0
      %p88 = por %p86, %p87
      %p89 = scmp.ne.s32.totalorder %s75, %s76
      %p90 = scmp.eq.s32.totalorder %s21, 1
      %p91 = por %p89, %p90
      %p93 = scmp.ne.s32.totalorder %s76, %s92
      %p94 = scmp.eq.s32.totalorder %s21, 0
      %p95 = por %p93, %p94
      %p96 = scmp.le.s32.totalorder 1, %s15
      %p97 = scmp.lt.s32.totalorder %s15, 3
      %p98 = pnand %p96, %p97
      %p99 = pneg %p98
      // Predicated region
      $region9: #{tpu_custom_call.1} parent=5 // pred_check
        _
      $region10: #{tpu_custom_call.1} parent=5 // pred_check_branch
        %101 = sbr.rel (%p98) target = $region12
      $region11: #{tpu_custom_call.1} parent=5 // pred_region
        %s102 = ssub.s32 %s15, 1
        // Predicated region
        $region13: #{tpu_custom_call.1} parent=11 // pred_check
          %p103 = pneg %p62
        $region14: #{tpu_custom_call.1} parent=11 // pred_check_branch
          %105 = sbr.rel (%p103) target = $region16
        $region15: #{tpu_custom_call.1} parent=11 // pred_region
          %s107 = ssub.s32 128, 128
          %108 = vsyncadd [#allocation7], %s107
          %s110 = sshll.u32 [#allocation6], 4
          %s111 = int_to_ptr.vmem [resolvable:$true] %s110
          %113 = dma.hbm_to_vmem [thread:$0]  %s1, 128, %s111, [#allocation7]
        $region16: #{tpu_custom_call.1} parent=11 // pred_fallthru
          _
      $region12: #{tpu_custom_call.1} parent=5 // pred_fallthru
        _
      %p114 = scmp.lt.s32.totalorder %s15, 2
      // Predicated region
      $region17: #{tpu_custom_call.1} parent=5 // pred_check
        %p115 = pneg %p114
      $region18: #{tpu_custom_call.1} parent=5 // pred_check_branch
        %117 = sbr.rel (%p115) target = $region20
      $region19: #{tpu_custom_call.1} parent=5 // pred_region
        // Predicated region
        $region21: #{tpu_custom_call.1} parent=19 // pred_check
          %p118 = pneg %p35
        $region22: #{tpu_custom_call.1} parent=19 // pred_check_branch
          %120 = sbr.rel (%p118) target = $region24
        $region23: #{tpu_custom_call.1} parent=19 // pred_region
          %s121 = sand.u32 %s25, 1
          %s122 = scalar_lea.sflag [#allocation4], %s121
          %s123 = sand.u32 %s25, 1
          %s124 = smul.addr %s123, 8
          %s125 = scalar_lea.vmem [#allocation3], %s124
          %s127 = ssub.s32 128, 128
          %128 = vsyncadd %s122, %s127
          %s129 = smul.addr %s15, 128
          %s130 = scalar_lea.hbm %s0, %s129
          %s132 = sshll.u32 %s125, 4
          %s133 = int_to_ptr.vmem [resolvable:$true] %s132
          %135 = dma.hbm_to_vmem [thread:$0]  %s130, 128, %s133, %s122
        $region24: #{tpu_custom_call.1} parent=19 // pred_fallthru
          _
      $region20: #{tpu_custom_call.1} parent=5 // pred_fallthru
        _
      %p136 = scmp.le.s32.totalorder 1, %s15
      %p137 = scmp.lt.s32.totalorder %s15, 3
      %p138 = pnand %p136, %p137
      %p139 = pneg %p138
      // Predicated region
      $region25: #{tpu_custom_call.1} parent=5 // pred_check
        _
      $region26: #{tpu_custom_call.1} parent=5 // pred_check_branch
        %141 = sbr.rel (%p138) target = $region28
      $region27: #{tpu_custom_call.1} parent=5 // pred_region
        %s142 = ssub.s32 %s15, 1
        %s143 = sand.u32 %s28, 1
        %s144 = scalar_lea.sflag [#allocation4], %s143
        %s145 = sand.u32 %s28, 1
        %s146 = smul.addr %s145, 8
        %s147 = scalar_lea.vmem [#allocation3], %s146
        // Predicated region
        $region29: #{tpu_custom_call.1} parent=27 // pred_check
          %p148 = pneg %p41
        $region30: #{tpu_custom_call.1} parent=27 // pred_check_branch
          %150 = sbr.rel (%p148) target = $region32
        $region31: #{tpu_custom_call.1} parent=27 // pred_region
          %151 = dma.done %s144, 128
        $region32: #{tpu_custom_call.1} parent=27 // pred_fallthru
          _
        // Predicated region
        $region33: #{tpu_custom_call.1} parent=27 // pred_check
          %p152 = pneg %p62
        $region34: #{tpu_custom_call.1} parent=27 // pred_check_branch
          %154 = sbr.rel (%p152) target = $region36
        $region35: #{tpu_custom_call.1} parent=27 // pred_region
          %155 = dma.done [#allocation7], 128
        $region36: #{tpu_custom_call.1} parent=27 // pred_fallthru
          _
        %s156 = sand.u32 %s28, 1
        %s157 = scalar_lea.sflag [#allocation4], %s156
        %s158 = sand.u32 %s28, 1
        %s159 = smul.addr %s158, 8
        %s160 = scalar_lea.vmem [#allocation3], %s159
        %p161 = pneg %p41
        %p162 = pneg %p38
        %p163 = pneg %p62
        %p164 = pneg %p59
        %p165 = pneg %p88
        %p166 = pneg %p85
        %s167 = sand.u32 %s75, 1
        %s168 = scalar_lea.sflag [#allocation5], %s167
        %s169 = sand.u32 %s75, 1
        %s170 = smul.addr %s169, 8
        %s171 = scalar_lea.vmem [#allocation8], %s170
        %v172 = vld [vmem:[%s147] sm:$0xff]
        %v173 = vld [vmem:[#allocation6] sm:$0xff]
        %v174 = vadd.f32 %v172, %v173
        %175 = vst [vmem:[#allocation2] sm:$0xff] %v174
        %v176 = vld [vmem:[#allocation2] sm:$0xff]
        %177 = vst [vmem:[%s171] sm:$0xff] %v176
        %s178 = sand.u32 %s75, 1
        %s179 = scalar_lea.sflag [#allocation5], %s178
        %s180 = sand.u32 %s75, 1
        %s181 = smul.addr %s180, 8
        %s182 = scalar_lea.vmem [#allocation8], %s181
        // Predicated region
        $region37: #{tpu_custom_call.1} parent=27 // pred_check
          %p183 = pneg %p85
        $region38: #{tpu_custom_call.1} parent=27 // pred_check_branch
          %185 = sbr.rel (%p183) target = $region40
        $region39: #{tpu_custom_call.1} parent=27 // pred_region
          %s187 = ssub.s32 128, 128
          %188 = vsyncadd %s179, %s187
          %s189 = smul.addr %s20, 128
          %s190 = scalar_lea.hbm %s2, %s189
          %s192 = sshll.u32 %s182, 4
          %s193 = int_to_ptr.vmem [resolvable:$true] %s192
          %195 = dma.vmem_to_hbm [thread:$0]  %s193, 128, %s190, %s179
        $region40: #{tpu_custom_call.1} parent=27 // pred_fallthru
          _
      $region28: #{tpu_custom_call.1} parent=5 // pred_fallthru
        _
      %p196 = scmp.le.s32.totalorder 2, %s15
      // Predicated region
      $region41: #{tpu_custom_call.1} parent=5 // pred_check
        %p197 = pneg %p196
      $region42: #{tpu_custom_call.1} parent=5 // pred_check_branch
        %199 = sbr.rel (%p197) target = $region44
      $region43: #{tpu_custom_call.1} parent=5 // pred_region
        %s200 = ssub.s32 %s15, 2
        // Predicated region
        $region45: #{tpu_custom_call.1} parent=43 // pred_check
          %p201 = pneg %p91
        $region46: #{tpu_custom_call.1} parent=43 // pred_check_branch
          %203 = sbr.rel (%p201) target = $region48
        $region47: #{tpu_custom_call.1} parent=43 // pred_region
          %s204 = sand.u32 %s76, 1
          %s205 = scalar_lea.sflag [#allocation5], %s204
          %s206 = sand.u32 %s76, 1
          %s207 = smul.addr %s206, 8
          %s208 = scalar_lea.vmem [#allocation8], %s207
          %209 = dma.done %s205, 128
        $region48: #{tpu_custom_call.1} parent=43 // pred_fallthru
          _
      $region44: #{tpu_custom_call.1} parent=5 // pred_fallthru
        _
    $region6: #{tpu_custom_call.1} parent=1 // loop_footer
      %s19 = sadd.s32 1, %s15
    $region7: #{tpu_custom_call.1} parent=1 // loop_footer_branch
      %14 = sbr.rel target = $region3
    $region8: #{tpu_custom_call.1} parent=1 // loop_exit
      _
    %210 = vsyncpa [#allocation4], 1
    %s211 = scalar_lea.sflag [#allocation4], 1
    %212 = vsyncpa %s211, 1
    %213 = vsyncpa [#allocation7], 1
    %214 = vsyncpa [#allocation5], 1
    %s215 = scalar_lea.sflag [#allocation5], 1
    %216 = vsyncpa %s215, 1

// kernel: tpu_custom_call.1
$region0: #{tpu_custom_call.1}
  #allocation0 [shape = 'u32[]', space=smem, size = 0x4, offset = 0x4, fixed_abs, tag = 'smem constant byte address 0x4 - core index']
  #allocation1 [shape = 'u32[144,128]{1,0:T(1,128)}', space=vmem, size = 0x12000, scoped, tag = 'internal scratch']
  #allocation2 [shape = 'bf16[8,96]{1,0:T(8,128)(2,1)}', space=vmem, size = 0x800, scoped, tag = 'scratch operand']
  #allocation3 [shape = 'bf16[8,32]{1,0:T(8,128)(2,1)}', space=vmem, size = 0x800, scoped, tag = 'scratch operand']
  %s0 = inlined_call_operand.hbm [shape: f32[2,8,32], index: 0, kind: input, shape index: {}]
  %s1 = inlined_call_operand.vmem [shape: f32[2,8,1], index: 1, kind: input, shape index: {}]
  %s2 = inlined_call_operand.vmem [shape: f32[2,1,1,8], index: 2, kind: input, shape index: {}]
  %s3 = inlined_call_operand.vmem [shape: bf16[2,32,96], index: 3, kind: input, shape index: {}]
  %s4 = inlined_call_operand.vmem [shape: bf16[2,32,32], index: 4, kind: input, shape index: {}]
  %s5 = inlined_call_operand.vmem [shape: bf16[2,32,64], index: 5, kind: input, shape index: {}]
  %s6 = inlined_call_operand.vmem [shape: f32[2,1,64], index: 6, kind: input, shape index: {}]
  %s7 = inlined_call_operand.vmem [shape: bf16[2,64,32], index: 7, kind: input, shape index: {}]
  %s8 = inlined_call_operand.vmem [shape: f32[2,1,32], index: 8, kind: input, shape index: {}]
  %s9 = inlined_call_operand.vmem [shape: f32[2,1,32], index: 9, kind: input, shape index: {}]
  %s10 = inlined_call_operand.vmem [shape: f32[2,1,32], index: 10, kind: input, shape index: {}]
  %s11 = inlined_call_operand.vmem [shape: f32[2,1,32], index: 11, kind: input, shape index: {}]
  %s12 = inlined_call_operand.vmem [shape: f32[2,1,32], index: 12, kind: input, shape index: {}]
  %s13 = inlined_call_operand.hbm [shape: f32[2,8,32], index: 13, kind: output, shape index: {}]
  %s14 = sld [smem:[#allocation0]]
  $region96: #{tpu_custom_call.1} parent=0
    _
  %s16 = ssub.s32 1, %s14
  %s17 = scalar_select 0, %s16, %s14
  $region1: #{tpu_custom_call.1} parent=0
    #allocation4 [shape = 'u8[8192]{0}', space=vmem, size = 0x2000, scoped, tag = 'input window, operand 0']
    #allocation5 [shape = 's32[2]{0}', space=sflag, size = 0x8, scoped, tag = 'scoped memory for tpu_custom_call.1']
    #allocation6 [shape = 's32[2]{0}', space=sflag, size = 0x8, scoped, tag = 'scoped memory for tpu_custom_call.1']
    #allocation7 [shape = 'u8[8192]{0}', space=vmem, size = 0x2000, scoped, tag = 'output window, operand 0']
    %18 = vsyncpa [#allocation5], 0
    %s19 = scalar_lea.sflag [#allocation5], 1
    %20 = vsyncpa %s19, 0
    %21 = vsyncpa [#allocation6], 0
    %s22 = scalar_lea.sflag [#allocation6], 1
    %23 = vsyncpa %s22, 0
    loop: start=0, step=1, limit=4
    $region2: #{tpu_custom_call.1} parent=1 // loop_pre_header
      _
    $region3: #{tpu_custom_call.1} parent=1 // loop_header
      %s25 = sphi 0, %s29
      %p26 = scmp.ge.s32.totalorder %s25, 4
      %s35 = sphi 0, %s37
      %s38 = sphi 0, %s35
      %s39 = sphi 0, %s38
      %s55 = sphi 0, %s39
      %s61 = sphi 0, %s63
      %s64 = sphi 0, %s61
      %s65 = sphi 0, %s64
      %s81 = sphi 0, %s65
      %s87 = sphi 0, %s89
      %s90 = sphi 0, %s87
      %s91 = sphi 0, %s90
      %s107 = sphi 0, %s91
      %s111 = sphi 0, %s111
      %s113 = sphi 0, %s111
      %s114 = sphi 0, %s113
      %s128 = sphi 0, %s114
      %s132 = sphi 0, %s132
      %s134 = sphi 0, %s132
      %s135 = sphi 0, %s134
      %s149 = sphi 0, %s135
      %s153 = sphi 0, %s153
      %s155 = sphi 0, %s153
      %s156 = sphi 0, %s155
      %s170 = sphi 0, %s156
      %s174 = sphi 0, %s174
      %s176 = sphi 0, %s174
      %s177 = sphi 0, %s176
      %s191 = sphi 0, %s177
      %s195 = sphi 0, %s195
      %s197 = sphi 0, %s195
      %s198 = sphi 0, %s197
      %s212 = sphi 0, %s198
      %s216 = sphi 0, %s216
      %s218 = sphi 0, %s216
      %s219 = sphi 0, %s218
      %s233 = sphi 0, %s219
      %s237 = sphi 0, %s237
      %s239 = sphi 0, %s237
      %s240 = sphi 0, %s239
      %s254 = sphi 0, %s240
      %s258 = sphi 0, %s258
      %s260 = sphi 0, %s258
      %s261 = sphi 0, %s260
      %s275 = sphi 0, %s261
      %s279 = sphi 0, %s279
      %s281 = sphi 0, %s279
      %s282 = sphi 0, %s281
      %s296 = sphi 0, %s282
      %s300 = sphi 0, %s300
      %s302 = sphi 0, %s300
      %s303 = sphi 0, %s302
      %s317 = sphi 0, %s303
      %s323 = sphi 0, %s325
      %s326 = sphi 0, %s323
      %s327 = sphi 0, %s326
      %s343 = sphi 0, %s327
    $region4: #{tpu_custom_call.1} parent=1 // loop_header_branch
      %28 = sbr.rel (%p26) target = $region8
    $region5: #{tpu_custom_call.1} parent=1 // loop_body
      %s30 = ssub.s32 %s25, 1
      %s31 = ssub.s32 %s25, 2
      %s32 = sadd.s32 %s25, 1
      %s33 = ssub.s32 %s25, %s32
      %p34 = scmp.eq.s32.totalorder %s33, 0
      %s36 = sadd.s32 %s35, 1
      %s37 = scalar_select %p34, %s35, %s36
      %p40 = pneg %p34
      %p41 = scmp.eq.s32.totalorder %s25, 1
      %p42 = por %p40, %p41
      %p43 = scmp.ne.s32.totalorder %s35, %s38
      %p44 = scmp.eq.s32.totalorder %s25, 0
      %p45 = por %p43, %p44
      %p46 = scmp.ne.s32.totalorder %s35, %s38
      %p47 = scmp.eq.s32.totalorder %s30, 1
      %p48 = por %p46, %p47
      %p49 = scmp.ne.s32.totalorder %s38, %s39
      %p50 = scmp.eq.s32.totalorder %s30, 0
      %p51 = por %p49, %p50
      %p52 = scmp.ne.s32.totalorder %s38, %s39
      %p53 = scmp.eq.s32.totalorder %s31, 1
      %p54 = por %p52, %p53
      %p56 = scmp.ne.s32.totalorder %s39, %s55
      %p57 = scmp.eq.s32.totalorder %s31, 0
      %p58 = por %p56, %p57
      %s59 = ssub.s32 %s25, %s32
      %p60 = scmp.eq.s32.totalorder %s59, 0
      %s62 = sadd.s32 %s61, 1
      %s63 = scalar_select %p60, %s61, %s62
      %p66 = pneg %p60
      %p67 = scmp.eq.s32.totalorder %s25, 1
      %p68 = por %p66, %p67
      %p69 = scmp.ne.s32.totalorder %s61, %s64
      %p70 = scmp.eq.s32.totalorder %s25, 0
      %p71 = por %p69, %p70
      %p72 = scmp.ne.s32.totalorder %s61, %s64
      %p73 = scmp.eq.s32.totalorder %s30, 1
      %p74 = por %p72, %p73
      %p75 = scmp.ne.s32.totalorder %s64, %s65
      %p76 = scmp.eq.s32.totalorder %s30, 0
      %p77 = por %p75, %p76
      %p78 = scmp.ne.s32.totalorder %s64, %s65
      %p79 = scmp.eq.s32.totalorder %s31, 1
      %p80 = por %p78, %p79
      %p82 = scmp.ne.s32.totalorder %s65, %s81
      %p83 = scmp.eq.s32.totalorder %s31, 0
      %p84 = por %p82, %p83
      %s85 = ssub.s32 %s25, %s32
      %p86 = scmp.eq.s32.totalorder %s85, 0
      %s88 = sadd.s32 %s87, 1
      %s89 = scalar_select %p86, %s87, %s88
      %p92 = pneg %p86
      %p93 = scmp.eq.s32.totalorder %s25, 1
      %p94 = por %p92, %p93
      %p95 = scmp.ne.s32.totalorder %s87, %s90
      %p96 = scmp.eq.s32.totalorder %s25, 0
      %p97 = por %p95, %p96
      %p98 = scmp.ne.s32.totalorder %s87, %s90
      %p99 = scmp.eq.s32.totalorder %s30, 1
      %p100 = por %p98, %p99
      %p101 = scmp.ne.s32.totalorder %s90, %s91
      %p102 = scmp.eq.s32.totalorder %s30, 0
      %p103 = por %p101, %p102
      %p104 = scmp.ne.s32.totalorder %s90, %s91
      %p105 = scmp.eq.s32.totalorder %s31, 1
      %p106 = por %p104, %p105
      %p108 = scmp.ne.s32.totalorder %s91, %s107
      %p109 = scmp.eq.s32.totalorder %s31, 0
      %p110 = por %p108, %p109
      %s112 = sadd.s32 %s111, 1
      %p115 = scmp.eq.s32.totalorder %s25, 1
      %p116 = scmp.ne.s32.totalorder %s111, %s113
      %p117 = scmp.eq.s32.totalorder %s25, 0
      %p118 = por %p116, %p117
      %p119 = scmp.ne.s32.totalorder %s111, %s113
      %p120 = scmp.eq.s32.totalorder %s30, 1
      %p121 = por %p119, %p120
      %p122 = scmp.ne.s32.totalorder %s113, %s114
      %p123 = scmp.eq.s32.totalorder %s30, 0
      %p124 = por %p122, %p123
      %p125 = scmp.ne.s32.totalorder %s113, %s114
      %p126 = scmp.eq.s32.totalorder %s31, 1
      %p127 = por %p125, %p126
      %p129 = scmp.ne.s32.totalorder %s114, %s128
      %p130 = scmp.eq.s32.totalorder %s31, 0
      %p131 = por %p129, %p130
      %s133 = sadd.s32 %s132, 1
      %p136 = scmp.eq.s32.totalorder %s25, 1
      %p137 = scmp.ne.s32.totalorder %s132, %s134
      %p138 = scmp.eq.s32.totalorder %s25, 0
      %p139 = por %p137, %p138
      %p140 = scmp.ne.s32.totalorder %s132, %s134
      %p141 = scmp.eq.s32.totalorder %s30, 1
      %p142 = por %p140, %p141
      %p143 = scmp.ne.s32.totalorder %s134, %s135
      %p144 = scmp.eq.s32.totalorder %s30, 0
      %p145 = por %p143, %p144
      %p146 = scmp.ne.s32.totalorder %s134, %s135
      %p147 = scmp.eq.s32.totalorder %s31, 1
      %p148 = por %p146, %p147
      %p150 = scmp.ne.s32.totalorder %s135, %s149
      %p151 = scmp.eq.s32.totalorder %s31, 0
      %p152 = por %p150, %p151
      %s154 = sadd.s32 %s153, 1
      %p157 = scmp.eq.s32.totalorder %s25, 1
      %p158 = scmp.ne.s32.totalorder %s153, %s155
      %p159 = scmp.eq.s32.totalorder %s25, 0
      %p160 = por %p158, %p159
      %p161 = scmp.ne.s32.totalorder %s153, %s155
      %p162 = scmp.eq.s32.totalorder %s30, 1
      %p163 = por %p161, %p162
      %p164 = scmp.ne.s32.totalorder %s155, %s156
      %p165 = scmp.eq.s32.totalorder %s30, 0
      %p166 = por %p164, %p165
      %p167 = scmp.ne.s32.totalorder %s155, %s156
      %p168 = scmp.eq.s32.totalorder %s31, 1
      %p169 = por %p167, %p168
      %p171 = scmp.ne.s32.totalorder %s156, %s170
      %p172 = scmp.eq.s32.totalorder %s31, 0
      %p173 = por %p171, %p172
      %s175 = sadd.s32 %s174, 1
      %p178 = scmp.eq.s32.totalorder %s25, 1
      %p179 = scmp.ne.s32.totalorder %s174, %s176
      %p180 = scmp.eq.s32.totalorder %s25, 0
      %p181 = por %p179, %p180
      %p182 = scmp.ne.s32.totalorder %s174, %s176
      %p183 = scmp.eq.s32.totalorder %s30, 1
      %p184 = por %p182, %p183
      %p185 = scmp.ne.s32.totalorder %s176, %s177
      %p186 = scmp.eq.s32.totalorder %s30, 0
      %p187 = por %p185, %p186
      %p188 = scmp.ne.s32.totalorder %s176, %s177
      %p189 = scmp.eq.s32.totalorder %s31, 1
      %p190 = por %p188, %p189
      %p192 = scmp.ne.s32.totalorder %s177, %s191
      %p193 = scmp.eq.s32.totalorder %s31, 0
      %p194 = por %p192, %p193
      %s196 = sadd.s32 %s195, 1
      %p199 = scmp.eq.s32.totalorder %s25, 1
      %p200 = scmp.ne.s32.totalorder %s195, %s197
      %p201 = scmp.eq.s32.totalorder %s25, 0
      %p202 = por %p200, %p201
      %p203 = scmp.ne.s32.totalorder %s195, %s197
      %p204 = scmp.eq.s32.totalorder %s30, 1
      %p205 = por %p203, %p204
      %p206 = scmp.ne.s32.totalorder %s197, %s198
      %p207 = scmp.eq.s32.totalorder %s30, 0
      %p208 = por %p206, %p207
      %p209 = scmp.ne.s32.totalorder %s197, %s198
      %p210 = scmp.eq.s32.totalorder %s31, 1
      %p211 = por %p209, %p210
      %p213 = scmp.ne.s32.totalorder %s198, %s212
      %p214 = scmp.eq.s32.totalorder %s31, 0
      %p215 = por %p213, %p214
      %s217 = sadd.s32 %s216, 1
      %p220 = scmp.eq.s32.totalorder %s25, 1
      %p221 = scmp.ne.s32.totalorder %s216, %s218
      %p222 = scmp.eq.s32.totalorder %s25, 0
      %p223 = por %p221, %p222
      %p224 = scmp.ne.s32.totalorder %s216, %s218
      %p225 = scmp.eq.s32.totalorder %s30, 1
      %p226 = por %p224, %p225
      %p227 = scmp.ne.s32.totalorder %s218, %s219
      %p228 = scmp.eq.s32.totalorder %s30, 0
      %p229 = por %p227, %p228
      %p230 = scmp.ne.s32.totalorder %s218, %s219
      %p231 = scmp.eq.s32.totalorder %s31, 1
      %p232 = por %p230, %p231
      %p234 = scmp.ne.s32.totalorder %s219, %s233
      %p235 = scmp.eq.s32.totalorder %s31, 0
      %p236 = por %p234, %p235
      %s238 = sadd.s32 %s237, 1
      %p241 = scmp.eq.s32.totalorder %s25, 1
      %p242 = scmp.ne.s32.totalorder %s237, %s239
      %p243 = scmp.eq.s32.totalorder %s25, 0
      %p244 = por %p242, %p243
      %p245 = scmp.ne.s32.totalorder %s237, %s239
      %p246 = scmp.eq.s32.totalorder %s30, 1
      %p247 = por %p245, %p246
      %p248 = scmp.ne.s32.totalorder %s239, %s240
      %p249 = scmp.eq.s32.totalorder %s30, 0
      %p250 = por %p248, %p249
      %p251 = scmp.ne.s32.totalorder %s239, %s240
      %p252 = scmp.eq.s32.totalorder %s31, 1
      %p253 = por %p251, %p252
      %p255 = scmp.ne.s32.totalorder %s240, %s254
      %p256 = scmp.eq.s32.totalorder %s31, 0
      %p257 = por %p255, %p256
      %s259 = sadd.s32 %s258, 1
      %p262 = scmp.eq.s32.totalorder %s25, 1
      %p263 = scmp.ne.s32.totalorder %s258, %s260
      %p264 = scmp.eq.s32.totalorder %s25, 0
      %p265 = por %p263, %p264
      %p266 = scmp.ne.s32.totalorder %s258, %s260
      %p267 = scmp.eq.s32.totalorder %s30, 1
      %p268 = por %p266, %p267
      %p269 = scmp.ne.s32.totalorder %s260, %s261
      %p270 = scmp.eq.s32.totalorder %s30, 0
      %p271 = por %p269, %p270
      %p272 = scmp.ne.s32.totalorder %s260, %s261
      %p273 = scmp.eq.s32.totalorder %s31, 1
      %p274 = por %p272, %p273
      %p276 = scmp.ne.s32.totalorder %s261, %s275
      %p277 = scmp.eq.s32.totalorder %s31, 0
      %p278 = por %p276, %p277
      %s280 = sadd.s32 %s279, 1
      %p283 = scmp.eq.s32.totalorder %s25, 1
      %p284 = scmp.ne.s32.totalorder %s279, %s281
      %p285 = scmp.eq.s32.totalorder %s25, 0
      %p286 = por %p284, %p285
      %p287 = scmp.ne.s32.totalorder %s279, %s281
      %p288 = scmp.eq.s32.totalorder %s30, 1
      %p289 = por %p287, %p288
      %p290 = scmp.ne.s32.totalorder %s281, %s282
      %p291 = scmp.eq.s32.totalorder %s30, 0
      %p292 = por %p290, %p291
      %p293 = scmp.ne.s32.totalorder %s281, %s282
      %p294 = scmp.eq.s32.totalorder %s31, 1
      %p295 = por %p293, %p294
      %p297 = scmp.ne.s32.totalorder %s282, %s296
      %p298 = scmp.eq.s32.totalorder %s31, 0
      %p299 = por %p297, %p298
      %s301 = sadd.s32 %s300, 1
      %p304 = scmp.eq.s32.totalorder %s25, 1
      %p305 = scmp.ne.s32.totalorder %s300, %s302
      %p306 = scmp.eq.s32.totalorder %s25, 0
      %p307 = por %p305, %p306
      %p308 = scmp.ne.s32.totalorder %s300, %s302
      %p309 = scmp.eq.s32.totalorder %s30, 1
      %p310 = por %p308, %p309
      %p311 = scmp.ne.s32.totalorder %s302, %s303
      %p312 = scmp.eq.s32.totalorder %s30, 0
      %p313 = por %p311, %p312
      %p314 = scmp.ne.s32.totalorder %s302, %s303
      %p315 = scmp.eq.s32.totalorder %s31, 1
      %p316 = por %p314, %p315
      %p318 = scmp.ne.s32.totalorder %s303, %s317
      %p319 = scmp.eq.s32.totalorder %s31, 0
      %p320 = por %p318, %p319
      %s321 = ssub.s32 %s25, %s32
      %p322 = scmp.eq.s32.totalorder %s321, 0
      %s324 = sadd.s32 %s323, 1
      %s325 = scalar_select %p322, %s323, %s324
      %p328 = pneg %p322
      %p329 = scmp.eq.s32.totalorder %s25, 1
      %p330 = por %p328, %p329
      %p331 = scmp.ne.s32.totalorder %s323, %s326
      %p332 = scmp.eq.s32.totalorder %s25, 0
      %p333 = por %p331, %p332
      %p334 = scmp.ne.s32.totalorder %s323, %s326
      %p335 = scmp.eq.s32.totalorder %s30, 1
      %p336 = por %p334, %p335
      %p337 = scmp.ne.s32.totalorder %s326, %s327
      %p338 = scmp.eq.s32.totalorder %s30, 0
      %p339 = por %p337, %p338
      %p340 = scmp.ne.s32.totalorder %s326, %s327
      %p341 = scmp.eq.s32.totalorder %s31, 1
      %p342 = por %p340, %p341
      %p344 = scmp.ne.s32.totalorder %s327, %s343
      %p345 = scmp.eq.s32.totalorder %s31, 0
      %p346 = por %p344, %p345
      %p347 = scmp.le.s32.totalorder 1, %s25
      %p348 = scmp.lt.s32.totalorder %s25, 3
      %p349 = pnand %p347, %p348
      %p350 = pneg %p349
      // Predicated region
      $region9: #{tpu_custom_call.1} parent=5 // pred_check
        _
      $region10: #{tpu_custom_call.1} parent=5 // pred_check_branch
        %352 = sbr.rel (%p349) target = $region12
      $region11: #{tpu_custom_call.1} parent=5 // pred_region
        %s353 = ssub.s32 %s25, 1
        // Predicated region
        $region13: #{tpu_custom_call.1} parent=11 // pred_check
          %p354 = pneg %p124
        $region14: #{tpu_custom_call.1} parent=11 // pred_check_branch
          %356 = sbr.rel (%p354) target = $region16
        $region15: #{tpu_custom_call.1} parent=11 // pred_region
          _
        $region16: #{tpu_custom_call.1} parent=11 // pred_fallthru
          _
        // Predicated region
        $region17: #{tpu_custom_call.1} parent=11 // pred_check
          %p357 = pneg %p145
        $region18: #{tpu_custom_call.1} parent=11 // pred_check_branch
          %359 = sbr.rel (%p357) target = $region20
        $region19: #{tpu_custom_call.1} parent=11 // pred_region
          _
        $region20: #{tpu_custom_call.1} parent=11 // pred_fallthru
          _
        // Predicated region
        $region21: #{tpu_custom_call.1} parent=11 // pred_check
          %p360 = pneg %p166
        $region22: #{tpu_custom_call.1} parent=11 // pred_check_branch
          %362 = sbr.rel (%p360) target = $region24
        $region23: #{tpu_custom_call.1} parent=11 // pred_region
          _
        $region24: #{tpu_custom_call.1} parent=11 // pred_fallthru
          _
        // Predicated region
        $region25: #{tpu_custom_call.1} parent=11 // pred_check
          %p363 = pneg %p187
        $region26: #{tpu_custom_call.1} parent=11 // pred_check_branch
          %365 = sbr.rel (%p363) target = $region28
        $region27: #{tpu_custom_call.1} parent=11 // pred_region
          _
        $region28: #{tpu_custom_call.1} parent=11 // pred_fallthru
          _
        // Predicated region
        $region29: #{tpu_custom_call.1} parent=11 // pred_check
          %p366 = pneg %p208
        $region30: #{tpu_custom_call.1} parent=11 // pred_check_branch
          %368 = sbr.rel (%p366) target = $region32
        $region31: #{tpu_custom_call.1} parent=11 // pred_region
          _
        $region32: #{tpu_custom_call.1} parent=11 // pred_fallthru
          _
        // Predicated region
        $region33: #{tpu_custom_call.1} parent=11 // pred_check
          %p369 = pneg %p229
        $region34: #{tpu_custom_call.1} parent=11 // pred_check_branch
          %371 = sbr.rel (%p369) target = $region36
        $region35: #{tpu_custom_call.1} parent=11 // pred_region
          _
        $region36: #{tpu_custom_call.1} parent=11 // pred_fallthru
          _
        // Predicated region
        $region37: #{tpu_custom_call.1} parent=11 // pred_check
          %p372 = pneg %p250
        $region38: #{tpu_custom_call.1} parent=11 // pred_check_branch
          %374 = sbr.rel (%p372) target = $region40
        $region39: #{tpu_custom_call.1} parent=11 // pred_region
          _
        $region40: #{tpu_custom_call.1} parent=11 // pred_fallthru
          _
        // Predicated region
        $region41: #{tpu_custom_call.1} parent=11 // pred_check
          %p375 = pneg %p271
        $region42: #{tpu_custom_call.1} parent=11 // pred_check_branch
          %377 = sbr.rel (%p375) target = $region44
        $region43: #{tpu_custom_call.1} parent=11 // pred_region
          _
        $region44: #{tpu_custom_call.1} parent=11 // pred_fallthru
          _
        // Predicated region
        $region45: #{tpu_custom_call.1} parent=11 // pred_check
          %p378 = pneg %p292
        $region46: #{tpu_custom_call.1} parent=11 // pred_check_branch
          %380 = sbr.rel (%p378) target = $region48
        $region47: #{tpu_custom_call.1} parent=11 // pred_region
          _
        $region48: #{tpu_custom_call.1} parent=11 // pred_fallthru
          _
        // Predicated region
        $region49: #{tpu_custom_call.1} parent=11 // pred_check
          %p381 = pneg %p313
        $region50: #{tpu_custom_call.1} parent=11 // pred_check_branch
          %383 = sbr.rel (%p381) target = $region52
        $region51: #{tpu_custom_call.1} parent=11 // pred_region
          _
        $region52: #{tpu_custom_call.1} parent=11 // pred_fallthru
          _
      $region12: #{tpu_custom_call.1} parent=5 // pred_fallthru
        _
      %p384 = scmp.lt.s32.totalorder %s25, 2
      // Predicated region
      $region53: #{tpu_custom_call.1} parent=5 // pred_check
        %p385 = pneg %p384
      $region54: #{tpu_custom_call.1} parent=5 // pred_check_branch
        %387 = sbr.rel (%p385) target = $region56
      $region55: #{tpu_custom_call.1} parent=5 // pred_region
        // Predicated region
        $region57: #{tpu_custom_call.1} parent=55 // pred_check
          %p388 = pneg %p45
        $region58: #{tpu_custom_call.1} parent=55 // pred_check_branch
          %390 = sbr.rel (%p388) target = $region60
        $region59: #{tpu_custom_call.1} parent=55 // pred_region
          %s391 = sand.u32 %s35, 1
          %s392 = scalar_lea.sflag [#allocation5], %s391
          %s393 = sand.u32 %s35, 1
          %s394 = smul.addr %s393, 8
          %s395 = scalar_lea.vmem [#allocation4], %s394
          %s397 = ssub.s32 128, 128
          %398 = vsyncadd %s392, %s397
          %s399 = smul.addr %s25, 128
          %s400 = scalar_lea.hbm %s0, %s399
          %s402 = sshll.u32 %s395, 4
          %s403 = int_to_ptr.vmem [resolvable:$true] %s402
          %405 = dma.hbm_to_vmem [thread:$0]  %s400, 128, %s403, %s392
        $region60: #{tpu_custom_call.1} parent=55 // pred_fallthru
          _
        // Predicated region
        $region61: #{tpu_custom_call.1} parent=55 // pred_check
          %p406 = pneg %p71
        $region62: #{tpu_custom_call.1} parent=55 // pred_check_branch
          %408 = sbr.rel (%p406) target = $region64
        $region63: #{tpu_custom_call.1} parent=55 // pred_region
          %p409 = scmp.lt.s32.totalorder %s25, 1
          %s410 = scalar_select %p409, %s25, 1
          %s411 = smul.addr %s410, 8
          %s412 = scalar_lea.vmem %s1, %s411
        $region64: #{tpu_custom_call.1} parent=55 // pred_fallthru
          _
        // Predicated region
        $region65: #{tpu_custom_call.1} parent=55 // pred_check
          %p413 = pneg %p97
        $region66: #{tpu_custom_call.1} parent=55 // pred_check_branch
          %415 = sbr.rel (%p413) target = $region68
        $region67: #{tpu_custom_call.1} parent=55 // pred_region
          %p416 = scmp.lt.s32.totalorder %s25, 1
          %s417 = scalar_select %p416, %s25, 1
          %s418 = scalar_lea.vmem %s2, %s417
        $region68: #{tpu_custom_call.1} parent=55 // pred_fallthru
          _
      $region56: #{tpu_custom_call.1} parent=5 // pred_fallthru
        _
      %p419 = scmp.le.s32.totalorder 1, %s25
      %p420 = scmp.lt.s32.totalorder %s25, 3
      %p421 = pnand %p419, %p420
      %p422 = pneg %p421
      // Predicated region
      $region69: #{tpu_custom_call.1} parent=5 // pred_check
        _
      $region70: #{tpu_custom_call.1} parent=5 // pred_check_branch
        %424 = sbr.rel (%p421) target = $region72
      $region71: #{tpu_custom_call.1} parent=5 // pred_region
        %s425 = ssub.s32 %s25, 1
        %s426 = sand.u32 %s38, 1
        %s427 = scalar_lea.sflag [#allocation5], %s426
        %s428 = sand.u32 %s38, 1
        %s429 = smul.addr %s428, 8
        %s430 = scalar_lea.vmem [#allocation4], %s429
        // Predicated region
        $region73: #{tpu_custom_call.1} parent=71 // pred_check
          %p431 = pneg %p51
        $region74: #{tpu_custom_call.1} parent=71 // pred_check_branch
          %433 = sbr.rel (%p431) target = $region76
        $region75: #{tpu_custom_call.1} parent=71 // pred_region
          %434 = dma.done %s427, 128
        $region76: #{tpu_custom_call.1} parent=71 // pred_fallthru
          _
        %s435 = sand.u32 %s38, 1
        %s436 = scalar_lea.sflag [#allocation5], %s435
        %s437 = sand.u32 %s38, 1
        %s438 = smul.addr %s437, 8
        %s439 = scalar_lea.vmem [#allocation4], %s438
        %p440 = pneg %p51
        %p441 = pneg %p48
        %p442 = scmp.lt.s32.totalorder %s30, 1
        %s443 = scalar_select %p442, %s30, 1
        %s444 = smul.addr %s443, 8
        %s445 = scalar_lea.vmem %s1, %s444
        %p446 = pneg %p77
        %p447 = pneg %p74
        %p448 = scmp.lt.s32.totalorder %s30, 1
        %s449 = scalar_select %p448, %s30, 1
        %s450 = scalar_lea.vmem %s2, %s449
        %p451 = pneg %p103
        %p452 = pneg %p100
        %p453 = pneg %p124
        %p454 = pneg %p121
        %p455 = pneg %p145
        %p456 = pneg %p142
        %p457 = pneg %p166
        %p458 = pneg %p163
        %p459 = pneg %p187
        %p460 = pneg %p184
        %p461 = pneg %p208
        %p462 = pneg %p205
        %p463 = pneg %p229
        %p464 = pneg %p226
        %p465 = pneg %p250
        %p466 = pneg %p247
        %p467 = pneg %p271
        %p468 = pneg %p268
        %p469 = pneg %p292
        %p470 = pneg %p289
        %p471 = pneg %p313
        %p472 = pneg %p310
        %p473 = pneg %p339
        %p474 = pneg %p336
        %s475 = sand.u32 %s326, 1
        %s476 = scalar_lea.sflag [#allocation6], %s475
        %s477 = sand.u32 %s326, 1
        %s478 = smul.addr %s477, 8
        %s479 = scalar_lea.vmem [#allocation7], %s478
        %p480 = scmp.lt.s32.totalorder %s30, 1
        %s481 = scalar_select %p480, %s30, 1
        %s482 = smul.addr %s481, 8
        %s483 = scalar_lea.vmem %s1, %s482
        %p484 = scmp.lt.s32.totalorder %s30, 1
        %s485 = scalar_select %p484, %s30, 1
        %s486 = scalar_lea.vmem %s2, %s485
        %v488 = vld [vmem:[%s483] sm:$0xff]
        %v489 = vsub.f32 1.0, %v488
        %v490 = vld [vmem:[%s430] sm:$0xff]
        loop: start=0, step=1, limit=2
        $region77: #{tpu_custom_call.1} parent=71 // loop_pre_header
          _
        $region78: #{tpu_custom_call.1} parent=71 // loop_header
          %s492 = sphi 0, %s496
          %p493 = scmp.ge.s32.totalorder %s492, 2
          %v497 = vphi %v490, %v1131
        $region79: #{tpu_custom_call.1} parent=71 // loop_header_branch
          %495 = sbr.rel (%p493) target = $region83
        $region80: #{tpu_custom_call.1} parent=71 // loop_body
          %v498 = vpack.c.bf16 %v497, %v497
          %s499 = smul.u32 %s492, 4
          %s500 = smul.addr %s499, 4
          %s501 = scalar_lea.vmem %s3, %s500
          %v502 = vld [vmem:[%s501] sm:$0xf]
          %v503 = vld [vmem:[%s501 + $0x4] sm:$0xf]
          %v504 = vld [vmem:[%s501 + $0x8] sm:$0xf]
          %v505 = vld [vmem:[%s501 + $0xc] sm:$0xf]
          %v510 = vunpack.c.l.b16 %v502
          %v511 = vunpack.c.l.b16 %v503
          %v512 = vunpack.c.l.b16 %v504
          %v513 = vunpack.c.l.b16 %v505
          %v514 = vpack.c.b16 %v511, %v510
          %v515 = vpack.c.b16 %v513, %v512
          %vm518 = vcmask 261120
          %v520 = vsel %vm518, %v498, 0
          %522 = vmatprep.subr.bf16.mxu0 0
          %523 = vmatpush1.bf16.msra.mxu0 %v514
          %524 = vmatprep.subr.bf16.mxu0 0
          %525 = vmatpush1.bf16.msra.mxu0 %v515
          %526 = vmatprep.subr.bf16.mxu0 0
          %527 = vmatpush1.bf16.msra.mxu0 0
          %528 = vmatprep.subr.bf16.mxu0 0
          %529 = vmatpush1.bf16.msra.mxu0 0
          %530 = vmatprep.subr.bf16.mxu0 0
          %531 = vmatpush1.bf16.msra.mxu0 0
          %532 = vmatprep.subr.bf16.mxu0 0
          %533 = vmatpush1.bf16.msra.mxu0 0
          %534 = vmatprep.subr.bf16.mxu0 0
          %535 = vmatpush1.bf16.msra.mxu0 0
          %536 = vmatprep.subr.bf16.mxu0 0
          %537 = vmatpush1.bf16.msra.mxu0 0
          %538 = vmatprep.subr.bf16.mxu0 0
          %539 = vmatpush1.bf16.msra.mxu0 0
          %540 = vmatprep.subr.bf16.mxu0 0
          %541 = vmatpush1.bf16.msra.mxu0 0
          %542 = vmatprep.subr.bf16.mxu0 0
          %543 = vmatpush1.bf16.msra.mxu0 0
          %544 = vmatprep.subr.bf16.mxu0 0
          %545 = vmatpush1.bf16.msra.mxu0 0
          %546 = vmatprep.subr.bf16.mxu0 0
          %547 = vmatpush1.bf16.msra.mxu0 0
          %548 = vmatprep.subr.bf16.mxu0 0
          %549 = vmatpush1.bf16.msra.mxu0 0
          %550 = vmatprep.subr.bf16.mxu0 0
          %551 = vmatpush1.bf16.msra.mxu0 0
          %552 = vmatprep.subr.bf16.mxu0 0
          %553 = vmatpush1.bf16.msra.mxu0 0
          %554 = vmatprep.mubr.bf16.mxu0 0
          %555 = vmatmul.mubr.bf16.gmra.mrb[0].mxu0 %v520
          %v556 = vpop.f32.mrb[0].mxu0
          %v557 = vadd.f32 0.0, %v556
          %v558 = vpop.f32.mrb[0].mxu0
          %v559 = vpop.f32.mrb[0].mxu0
          %v560 = vpop.f32.mrb[0].mxu0
          %561 = vdwg.mxu0
          %v562 = vpack.c.bf16 %v557, %v557
          %vm563 = vcmask 781312
          %564 = vst.msk [vmem:[#allocation2] sm:$0xf] %vm563, %v562
          %v565 = vld [vmem:[#allocation2] sm:$0xf]
          %v566 = vld [vmem:[#allocation2] sm:$0xf]
          %v567 = vld [vmem:[%s486] sm:$0x1]
          %v569 = vlaneseq
          %v570 = vshrl.u32 %v569, 7
          %v571 = vsub.s32 0, %v570
          %v572 = vrot.slane %v567, %v571
          %v575 = vunpack.c.l.b16 %v566
          %v576 = vpack.c.b16 %v575, %v575
          %577 = vrot.lane.b32.xlu0 %v576, 96
          %v578 = vpop.permute.xlu0 %577
          %vm579 = vcmask 130048
          %v581 = vsel %vm579, %v565, 0
          %v584 = vsel %vm579, %v578, 0
          %586 = vmatprep.subr.bf16.mxu0 0
          %587 = vmatpush1.bf16.xpose.msra.mxu0 %v584
          %588 = vmatprep.subr.bf16.mxu0 0
          %589 = vmatpush1.bf16.xpose.msra.mxu0 0
          %590 = vmatprep.subr.bf16.mxu0 0
          %591 = vmatpush1.bf16.xpose.msra.mxu0 0
          %592 = vmatprep.subr.bf16.mxu0 0
          %593 = vmatpush1.bf16.xpose.msra.mxu0 0
          %594 = vmatprep.subr.bf16.mxu0 0
          %595 = vmatpush1.bf16.xpose.msra.mxu0 0
          %596 = vmatprep.subr.bf16.mxu0 0
          %597 = vmatpush1.bf16.xpose.msra.mxu0 0
          %598 = vmatprep.subr.bf16.mxu0 0
          %599 = vmatpush1.bf16.xpose.msra.mxu0 0
          %600 = vmatprep.subr.bf16.mxu0 0
          %601 = vmatpush1.bf16.xpose.msra.mxu0 0
          %602 = vmatprep.subr.bf16.mxu0 0
          %603 = vmatpush1.bf16.xpose.msra.mxu0 0
          %604 = vmatprep.subr.bf16.mxu0 0
          %605 = vmatpush1.bf16.xpose.msra.mxu0 0
          %606 = vmatprep.subr.bf16.mxu0 0
          %607 = vmatpush1.bf16.xpose.msra.mxu0 0
          %608 = vmatprep.subr.bf16.mxu0 0
          %609 = vmatpush1.bf16.xpose.msra.mxu0 0
          %610 = vmatprep.subr.bf16.mxu0 0
          %611 = vmatpush1.bf16.xpose.msra.mxu0 0
          %612 = vmatprep.subr.bf16.mxu0 0
          %613 = vmatpush1.bf16.xpose.msra.mxu0 0
          %614 = vmatprep.subr.bf16.mxu0 0
          %615 = vmatpush1.bf16.xpose.msra.mxu0 0
          %616 = vmatprep.subr.bf16.mxu0 0
          %617 = vmatpush1.bf16.xpose.msra.mxu0 0
          %618 = vmatprep.mubr.bf16.mxu0 0
          %619 = vmatmul.mubr.bf16.gmra.mrb[0].mxu0 %v581
          %v620 = vpop.f32.mrb[0].mxu0
          %v621 = vadd.f32 %v572, %v620
          %v622 = vpop.f32.mrb[0].mxu0
          %v623 = vpop.f32.mrb[0].mxu0
          %v624 = vpop.f32.mrb[0].mxu0
          %625 = vdwg.mxu0
          %vm626 = vcmask 64512
          %v627 = vsel %vm626, %v621, -inf
          %628 = vmax.xlane.f32.xlu0 %v627
          %v629 = vpop.xlane.xlu0 %628
          %v630 = vmax.f32 %v629, -1e+30
          %v631 = vsub.f32 -1e+30, %v630
          %v632 = vmul.f32 %v631, 1.442695
          %v633 = vpow.pop %v632
          %v634 = vsub.f32 %v621, %v630
          %v635 = vmul.f32 %v634, 1.442695
          %v636 = vpow.pop %v635
          %v637 = vmul.f32 %v633, 0.0
          %v638 = vsel %vm626, %v636, 0.0
          %639 = vadd.xlane.f32.xlu0 %v638
          %v640 = vpop.xlane.xlu0 %639
          %v641 = vadd.f32 %v637, %v640
          %v642 = vpack.c.bf16 %v636, %v636
          %643 = vrot.lane.b32.xlu0 %v576, 64
          %v644 = vpop.permute.xlu0 %643
          %v646 = vsel %vm626, %v642, 0
          %vm648 = vcmask 1043456
          %v650 = vsel %vm648, %v644, 0
          %652 = vmatprep.subr.bf16.mxu0 0
          %653 = vmatpush1.bf16.msra.mxu0 %v650
          %654 = vmatprep.subr.bf16.mxu0 0
          %655 = vmatpush1.bf16.msra.mxu0 0
          %656 = vmatprep.subr.bf16.mxu0 0
          %657 = vmatpush1.bf16.msra.mxu0 0
          %658 = vmatprep.subr.bf16.mxu0 0
          %659 = vmatpush1.bf16.msra.mxu0 0
          %660 = vmatprep.subr.bf16.mxu0 0
          %661 = vmatpush1.bf16.msra.mxu0 0
          %662 = vmatprep.subr.bf16.mxu0 0
          %663 = vmatpush1.bf16.msra.mxu0 0
          %664 = vmatprep.subr.bf16.mxu0 0
          %665 = vmatpush1.bf16.msra.mxu0 0
          %666 = vmatprep.subr.bf16.mxu0 0
          %667 = vmatpush1.bf16.msra.mxu0 0
          %668 = vmatprep.subr.bf16.mxu0 0
          %669 = vmatpush1.bf16.msra.mxu0 0
          %670 = vmatprep.subr.bf16.mxu0 0
          %671 = vmatpush1.bf16.msra.mxu0 0
          %672 = vmatprep.subr.bf16.mxu0 0
          %673 = vmatpush1.bf16.msra.mxu0 0
          %674 = vmatprep.subr.bf16.mxu0 0
          %675 = vmatpush1.bf16.msra.mxu0 0
          %676 = vmatprep.subr.bf16.mxu0 0
          %677 = vmatpush1.bf16.msra.mxu0 0
          %678 = vmatprep.subr.bf16.mxu0 0
          %679 = vmatpush1.bf16.msra.mxu0 0
          %680 = vmatprep.subr.bf16.mxu0 0
          %681 = vmatpush1.bf16.msra.mxu0 0
          %682 = vmatprep.subr.bf16.mxu0 0
          %683 = vmatpush1.bf16.msra.mxu0 0
          %684 = vmatprep.mubr.bf16.mxu0 0
          %685 = vmatmul.mubr.bf16.gmra.mrb[0].mxu0 %v646
          %v686 = vpop.f32.mrb[0].mxu0
          %v687 = vadd.f32 0.0, %v686
          %v688 = vpop.f32.mrb[0].mxu0
          %v689 = vpop.f32.mrb[0].mxu0
          %v690 = vpop.f32.mrb[0].mxu0
          %691 = vdwg.mxu0
          %v692 = vadd.f32 %v637, %v687
          %v693 = vrcp.pop %v641
          %v694 = vmul.f32 %v692, %v693
          %v695 = vpack.c.bf16 %v694, %v694
          %vm696 = vcmask 125952
          %697 = vst.msk [vmem:[#allocation3] sm:$0xf] %vm696, %v695
          %v698 = vld [vmem:[#allocation2] sm:$0xf]
          %v699 = vld [vmem:[#allocation2] sm:$0xf]
          %v700 = vld [vmem:[%s486] sm:$0x1]
          %v702 = vlaneseq
          %v703 = vshrl.u32 %v702, 7
          %v704 = vsub.s32 0, %v703
          %v705 = vrot.slane %v700, %v704
          %v708 = vunpack.c.l.b16 %v698
          %v709 = vpack.c.b16 %v708, %v708
          %710 = vrot.lane.b32.xlu0 %v709, 112
          %v711 = vpop.permute.xlu0 %710
          %v713 = vunpack.c.l.b16 %v699
          %v714 = vpack.c.b16 %v713, %v713
          %715 = vrot.lane.b32.xlu0 %v714, 80
          %v716 = vpop.permute.xlu0 %715
          %v718 = vsel %vm579, %v711, 0
          %v721 = vsel %vm579, %v716, 0
          %723 = vmatprep.subr.bf16.mxu0 0
          %724 = vmatpush1.bf16.xpose.msra.mxu0 %v721
          %725 = vmatprep.subr.bf16.mxu0 0
          %726 = vmatpush1.bf16.xpose.msra.mxu0 0
          %727 = vmatprep.subr.bf16.mxu0 0
          %728 = vmatpush1.bf16.xpose.msra.mxu0 0
          %729 = vmatprep.subr.bf16.mxu0 0
          %730 = vmatpush1.bf16.xpose.msra.mxu0 0
          %731 = vmatprep.subr.bf16.mxu0 0
          %732 = vmatpush1.bf16.xpose.msra.mxu0 0
          %733 = vmatprep.subr.bf16.mxu0 0
          %734 = vmatpush1.bf16.xpose.msra.mxu0 0
          %735 = vmatprep.subr.bf16.mxu0 0
          %736 = vmatpush1.bf16.xpose.msra.mxu0 0
          %737 = vmatprep.subr.bf16.mxu0 0
          %738 = vmatpush1.bf16.xpose.msra.mxu0 0
          %739 = vmatprep.subr.bf16.mxu0 0
          %740 = vmatpush1.bf16.xpose.msra.mxu0 0
          %741 = vmatprep.subr.bf16.mxu0 0
          %742 = vmatpush1.bf16.xpose.msra.mxu0 0
          %743 = vmatprep.subr.bf16.mxu0 0
          %744 = vmatpush1.bf16.xpose.msra.mxu0 0
          %745 = vmatprep.subr.bf16.mxu0 0
          %746 = vmatpush1.bf16.xpose.msra.mxu0 0
          %747 = vmatprep.subr.bf16.mxu0 0
          %748 = vmatpush1.bf16.xpose.msra.mxu0 0
          %749 = vmatprep.subr.bf16.mxu0 0
          %750 = vmatpush1.bf16.xpose.msra.mxu0 0
          %751 = vmatprep.subr.bf16.mxu0 0
          %752 = vmatpush1.bf16.xpose.msra.mxu0 0
          %753 = vmatprep.subr.bf16.mxu0 0
          %754 = vmatpush1.bf16.xpose.msra.mxu0 0
          %755 = vmatprep.mubr.bf16.mxu0 0
          %756 = vmatmul.mubr.bf16.gmra.mrb[0].mxu0 %v718
          %v757 = vpop.f32.mrb[0].mxu0
          %v758 = vadd.f32 %v705, %v757
          %v759 = vpop.f32.mrb[0].mxu0
          %v760 = vpop.f32.mrb[0].mxu0
          %v761 = vpop.f32.mrb[0].mxu0
          %762 = vdwg.mxu0
          %v763 = vsel %vm626, %v758, -inf
          %764 = vmax.xlane.f32.xlu0 %v763
          %v765 = vpop.xlane.xlu0 %764
          %v766 = vmax.f32 %v765, -1e+30
          %v767 = vsub.f32 -1e+30, %v766
          %v768 = vmul.f32 %v767, 1.442695
          %v769 = vpow.pop %v768
          %v770 = vsub.f32 %v758, %v766
          %v771 = vmul.f32 %v770, 1.442695
          %v772 = vpow.pop %v771
          %v773 = vmul.f32 %v769, 0.0
          %v774 = vsel %vm626, %v772, 0.0
          %775 = vadd.xlane.f32.xlu0 %v774
          %v776 = vpop.xlane.xlu0 %775
          %v777 = vadd.f32 %v773, %v776
          %v778 = vpack.c.bf16 %v772, %v772
          %779 = vrot.lane.b32.xlu0 %v714, 48
          %v780 = vpop.permute.xlu0 %779
          %v782 = vsel %vm626, %v778, 0
          %v785 = vsel %vm648, %v780, 0
          %787 = vmatprep.subr.bf16.mxu0 0
          %788 = vmatpush1.bf16.msra.mxu0 %v785
          %789 = vmatprep.subr.bf16.mxu0 0
          %790 = vmatpush1.bf16.msra.mxu0 0
          %791 = vmatprep.subr.bf16.mxu0 0
          %792 = vmatpush1.bf16.msra.mxu0 0
          %793 = vmatprep.subr.bf16.mxu0 0
          %794 = vmatpush1.bf16.msra.mxu0 0
          %795 = vmatprep.subr.bf16.mxu0 0
          %796 = vmatpush1.bf16.msra.mxu0 0
          %797 = vmatprep.subr.bf16.mxu0 0
          %798 = vmatpush1.bf16.msra.mxu0 0
          %799 = vmatprep.subr.bf16.mxu0 0
          %800 = vmatpush1.bf16.msra.mxu0 0
          %801 = vmatprep.subr.bf16.mxu0 0
          %802 = vmatpush1.bf16.msra.mxu0 0
          %803 = vmatprep.subr.bf16.mxu0 0
          %804 = vmatpush1.bf16.msra.mxu0 0
          %805 = vmatprep.subr.bf16.mxu0 0
          %806 = vmatpush1.bf16.msra.mxu0 0
          %807 = vmatprep.subr.bf16.mxu0 0
          %808 = vmatpush1.bf16.msra.mxu0 0
          %809 = vmatprep.subr.bf16.mxu0 0
          %810 = vmatpush1.bf16.msra.mxu0 0
          %811 = vmatprep.subr.bf16.mxu0 0
          %812 = vmatpush1.bf16.msra.mxu0 0
          %813 = vmatprep.subr.bf16.mxu0 0
          %814 = vmatpush1.bf16.msra.mxu0 0
          %815 = vmatprep.subr.bf16.mxu0 0
          %816 = vmatpush1.bf16.msra.mxu0 0
          %817 = vmatprep.subr.bf16.mxu0 0
          %818 = vmatpush1.bf16.msra.mxu0 0
          %819 = vmatprep.mubr.bf16.mxu0 0
          %820 = vmatmul.mubr.bf16.gmra.mrb[0].mxu0 %v782
          %v821 = vpop.f32.mrb[0].mxu0
          %v822 = vadd.f32 0.0, %v821
          %v823 = vpop.f32.mrb[0].mxu0
          %v824 = vpop.f32.mrb[0].mxu0
          %v825 = vpop.f32.mrb[0].mxu0
          %826 = vdwg.mxu0
          %v827 = vadd.f32 %v773, %v822
          %v828 = vrcp.pop %v777
          %v829 = vmul.f32 %v827, %v828
          %v830 = vpack.c.bf16 %v829, %v829
          %v832 = vunpack.c.l.b16 %v830
          %v833 = vpack.c.b16 %v832, %v832
          %834 = vrot.lane.b32.xlu0 %v833, 16
          %v835 = vpop.permute.xlu0 %834
          %vm837 = vcmask 257152
          %838 = vst.msk [vmem:[#allocation3] sm:$0xf] %vm837, %v835
          %v839 = vld [vmem:[#allocation3] sm:$0xf]
          %s840 = smul.addr %s499, 4
          %s841 = scalar_lea.vmem %s4, %s840
          %v842 = vld [vmem:[%s841] sm:$0xf]
          %v843 = vld [vmem:[%s841 + $0x4] sm:$0xf]
          %v844 = vld [vmem:[%s841 + $0x8] sm:$0xf]
          %v845 = vld [vmem:[%s841 + $0xc] sm:$0xf]
          %v850 = vunpack.c.l.b16 %v842
          %v851 = vunpack.c.l.b16 %v843
          %v852 = vunpack.c.l.b16 %v844
          %v853 = vunpack.c.l.b16 %v845
          %v854 = vpack.c.b16 %v851, %v850
          %v855 = vpack.c.b16 %v853, %v852
          %v859 = vsel %vm518, %v839, 0
          %861 = vmatprep.subr.bf16.mxu0 0
          %862 = vmatpush1.bf16.msra.mxu0 %v854
          %863 = vmatprep.subr.bf16.mxu0 0
          %864 = vmatpush1.bf16.msra.mxu0 %v855
          %865 = vmatprep.subr.bf16.mxu0 0
          %866 = vmatpush1.bf16.msra.mxu0 0
          %867 = vmatprep.subr.bf16.mxu0 0
          %868 = vmatpush1.bf16.msra.mxu0 0
          %869 = vmatprep.subr.bf16.mxu0 0
          %870 = vmatpush1.bf16.msra.mxu0 0
          %871 = vmatprep.subr.bf16.mxu0 0
          %872 = vmatpush1.bf16.msra.mxu0 0
          %873 = vmatprep.subr.bf16.mxu0 0
          %874 = vmatpush1.bf16.msra.mxu0 0
          %875 = vmatprep.subr.bf16.mxu0 0
          %876 = vmatpush1.bf16.msra.mxu0 0
          %877 = vmatprep.subr.bf16.mxu0 0
          %878 = vmatpush1.bf16.msra.mxu0 0
          %879 = vmatprep.subr.bf16.mxu0 0
          %880 = vmatpush1.bf16.msra.mxu0 0
          %881 = vmatprep.subr.bf16.mxu0 0
          %882 = vmatpush1.bf16.msra.mxu0 0
          %883 = vmatprep.subr.bf16.mxu0 0
          %884 = vmatpush1.bf16.msra.mxu0 0
          %885 = vmatprep.subr.bf16.mxu0 0
          %886 = vmatpush1.bf16.msra.mxu0 0
          %887 = vmatprep.subr.bf16.mxu0 0
          %888 = vmatpush1.bf16.msra.mxu0 0
          %889 = vmatprep.subr.bf16.mxu0 0
          %890 = vmatpush1.bf16.msra.mxu0 0
          %891 = vmatprep.subr.bf16.mxu0 0
          %892 = vmatpush1.bf16.msra.mxu0 0
          %893 = vmatprep.mubr.bf16.mxu0 0
          %894 = vmatmul.mubr.bf16.gmra.mrb[0].mxu0 %v859
          %v895 = vpop.f32.mrb[0].mxu0
          %v896 = vadd.f32 0.0, %v895
          %v897 = vpop.f32.mrb[0].mxu0
          %v898 = vpop.f32.mrb[0].mxu0
          %v899 = vpop.f32.mrb[0].mxu0
          %900 = vdwg.mxu0
          %v901 = vadd.f32 %v497, %v896
          %s902 = scalar_lea.vmem %s9, %s492
          %v903 = vld [vmem:[%s902] sm:$0x1]
          %s904 = scalar_lea.vmem %s10, %s492
          %v905 = vld [vmem:[%s904] sm:$0x1]
          %v906 = vsel %vm518, %v901, 0.0
          %907 = vadd.xlane.f32.xlu0 %v906
          %v908 = vpop.xlane.xlu0 %907
          %v909 = vrcp.pop 32.0
          %v910 = vmul.f32 %v908, %v909
          %v911 = vsub.f32 %v901, %v910
          %v912 = vmul.f32 %v911, %v911
          %v913 = vsel %vm518, %v912, 0.0
          %914 = vadd.xlane.f32.xlu0 %v913
          %v915 = vpop.xlane.xlu0 %914
          %v916 = vmul.f32 %v915, %v909
          %v917 = vadd.f32 %v916, 1e-05
          %v918 = vrsqrt.pop %v917
          %v919 = vmul.f32 %v911, %v918
          %v921 = vlaneseq
          %v922 = vshrl.u32 %v921, 7
          %v923 = vsub.s32 0, %v922
          %v924 = vrot.slane %v903, %v923
          %v926 = vmul.f32 %v919, %v924
          %v928 = vlaneseq
          %v929 = vshrl.u32 %v928, 7
          %v930 = vsub.s32 0, %v929
          %v931 = vrot.slane %v905, %v930
          %v933 = vadd.f32 %v926, %v931
          %935 = vset.pattern.permute.xlu0 0
          %936 = vperm.xlu0 %935, %v489
          %v937 = vpop.permute.xlu0 %936
          %v939 = vmul.f32 %v933, %v937
          %v940 = vpack.c.bf16 %v939, %v939
          %s941 = smul.addr %s499, 4
          %s942 = scalar_lea.vmem %s5, %s941
          %v943 = vld [vmem:[%s942] sm:$0xf]
          %v944 = vld [vmem:[%s942 + $0x4] sm:$0xf]
          %v945 = vld [vmem:[%s942 + $0x8] sm:$0xf]
          %v946 = vld [vmem:[%s942 + $0xc] sm:$0xf]
          %s947 = scalar_lea.vmem %s6, %s492
          %v948 = vld [vmem:[%s947] sm:$0x1]
          %v950 = vlaneseq
          %v951 = vshrl.u32 %v950, 7
          %v952 = vsub.s32 0, %v951
          %v953 = vrot.slane %v948, %v952
          %v959 = vunpack.c.l.b16 %v943
          %v960 = vunpack.c.l.b16 %v944
          %v961 = vunpack.c.l.b16 %v945
          %v962 = vunpack.c.l.b16 %v946
          %v963 = vpack.c.b16 %v960, %v959
          %v964 = vpack.c.b16 %v962, %v961
          %v968 = vsel %vm518, %v940, 0
          %970 = vmatprep.subr.bf16.mxu0 0
          %971 = vmatpush1.bf16.msra.mxu0 %v963
          %972 = vmatprep.subr.bf16.mxu0 0
          %973 = vmatpush1.bf16.msra.mxu0 %v964
          %974 = vmatprep.subr.bf16.mxu0 0
          %975 = vmatpush1.bf16.msra.mxu0 0
          %976 = vmatprep.subr.bf16.mxu0 0
          %977 = vmatpush1.bf16.msra.mxu0 0
          %978 = vmatprep.subr.bf16.mxu0 0
          %979 = vmatpush1.bf16.msra.mxu0 0
          %980 = vmatprep.subr.bf16.mxu0 0
          %981 = vmatpush1.bf16.msra.mxu0 0
          %982 = vmatprep.subr.bf16.mxu0 0
          %983 = vmatpush1.bf16.msra.mxu0 0
          %984 = vmatprep.subr.bf16.mxu0 0
          %985 = vmatpush1.bf16.msra.mxu0 0
          %986 = vmatprep.subr.bf16.mxu0 0
          %987 = vmatpush1.bf16.msra.mxu0 0
          %988 = vmatprep.subr.bf16.mxu0 0
          %989 = vmatpush1.bf16.msra.mxu0 0
          %990 = vmatprep.subr.bf16.mxu0 0
          %991 = vmatpush1.bf16.msra.mxu0 0
          %992 = vmatprep.subr.bf16.mxu0 0
          %993 = vmatpush1.bf16.msra.mxu0 0
          %994 = vmatprep.subr.bf16.mxu0 0
          %995 = vmatpush1.bf16.msra.mxu0 0
          %996 = vmatprep.subr.bf16.mxu0 0
          %997 = vmatpush1.bf16.msra.mxu0 0
          %998 = vmatprep.subr.bf16.mxu0 0
          %999 = vmatpush1.bf16.msra.mxu0 0
          %1000 = vmatprep.subr.bf16.mxu0 0
          %1001 = vmatpush1.bf16.msra.mxu0 0
          %1002 = vmatprep.mubr.bf16.mxu0 0
          %1003 = vmatmul.mubr.bf16.gmra.mrb[0].mxu0 %v968
          %v1004 = vpop.f32.mrb[0].mxu0
          %v1005 = vadd.f32 %v953, %v1004
          %v1006 = vpop.f32.mrb[0].mxu0
          %v1007 = vpop.f32.mrb[0].mxu0
          %v1008 = vpop.f32.mrb[0].mxu0
          %1009 = vdwg.mxu0
          %v1010 = vmax.f32 %v1005, 0.0
          %v1011 = vpack.c.bf16 %v1010, %v1010
          %s1012 = smul.u32 %s492, 8
          %s1013 = smul.addr %s1012, 4
          %s1014 = scalar_lea.vmem %s7, %s1013
          %v1015 = vld [vmem:[%s1014] sm:$0xf]
          %v1016 = vld [vmem:[%s1014 + $0x4] sm:$0xf]
          %v1017 = vld [vmem:[%s1014 + $0x8] sm:$0xf]
          %v1018 = vld [vmem:[%s1014 + $0xc] sm:$0xf]
          %v1019 = vld [vmem:[%s1014 + $0x10] sm:$0xf]
          %v1020 = vld [vmem:[%s1014 + $0x14] sm:$0xf]
          %v1021 = vld [vmem:[%s1014 + $0x18] sm:$0xf]
          %v1022 = vld [vmem:[%s1014 + $0x1c] sm:$0xf]
          %s1023 = scalar_lea.vmem %s8, %s492
          %v1024 = vld [vmem:[%s1023] sm:$0x1]
          %v1026 = vlaneseq
          %v1027 = vshrl.u32 %v1026, 7
          %v1028 = vsub.s32 0, %v1027
          %v1029 = vrot.slane %v1024, %v1028
          %v1039 = vunpack.c.l.b16 %v1015
          %v1040 = vunpack.c.l.b16 %v1016
          %v1041 = vunpack.c.l.b16 %v1017
          %v1042 = vunpack.c.l.b16 %v1018
          %v1043 = vunpack.c.l.b16 %v1019
          %v1044 = vunpack.c.l.b16 %v1020
          %v1045 = vunpack.c.l.b16 %v1021
          %v1046 = vunpack.c.l.b16 %v1022
          %v1047 = vpack.c.b16 %v1040, %v1039
          %v1048 = vpack.c.b16 %v1042, %v1041
          %v1049 = vpack.c.b16 %v1044, %v1043
          %v1050 = vpack.c.b16 %v1046, %v1045
          %vm1055 = vcmask 523264
          %v1057 = vsel %vm1055, %v1011, 0
          %1059 = vmatprep.subr.bf16.mxu0 0
          %1060 = vmatpush1.bf16.msra.mxu0 %v1047
          %1061 = vmatprep.subr.bf16.mxu0 0
          %1062 = vmatpush1.bf16.msra.mxu0 %v1048
          %1063 = vmatprep.subr.bf16.mxu0 0
          %1064 = vmatpush1.bf16.msra.mxu0 %v1049
          %1065 = vmatprep.subr.bf16.mxu0 0
          %1066 = vmatpush1.bf16.msra.mxu0 %v1050
          %1067 = vmatprep.subr.bf16.mxu0 0
          %1068 = vmatpush1.bf16.msra.mxu0 0
          %1069 = vmatprep.subr.bf16.mxu0 0
          %1070 = vmatpush1.bf16.msra.mxu0 0
          %1071 = vmatprep.subr.bf16.mxu0 0
          %1072 = vmatpush1.bf16.msra.mxu0 0
          %1073 = vmatprep.subr.bf16.mxu0 0
          %1074 = vmatpush1.bf16.msra.mxu0 0
          %1075 = vmatprep.subr.bf16.mxu0 0
          %1076 = vmatpush1.bf16.msra.mxu0 0
          %1077 = vmatprep.subr.bf16.mxu0 0
          %1078 = vmatpush1.bf16.msra.mxu0 0
          %1079 = vmatprep.subr.bf16.mxu0 0
          %1080 = vmatpush1.bf16.msra.mxu0 0
          %1081 = vmatprep.subr.bf16.mxu0 0
          %1082 = vmatpush1.bf16.msra.mxu0 0
          %1083 = vmatprep.subr.bf16.mxu0 0
          %1084 = vmatpush1.bf16.msra.mxu0 0
          %1085 = vmatprep.subr.bf16.mxu0 0
          %1086 = vmatpush1.bf16.msra.mxu0 0
          %1087 = vmatprep.subr.bf16.mxu0 0
          %1088 = vmatpush1.bf16.msra.mxu0 0
          %1089 = vmatprep.subr.bf16.mxu0 0
          %1090 = vmatpush1.bf16.msra.mxu0 0
          %1091 = vmatprep.mubr.bf16.mxu0 0
          %1092 = vmatmul.mubr.bf16.gmra.mrb[0].mxu0 %v1057
          %v1093 = vpop.f32.mrb[0].mxu0
          %v1094 = vadd.f32 %v1029, %v1093
          %v1095 = vpop.f32.mrb[0].mxu0
          %v1096 = vpop.f32.mrb[0].mxu0
          %v1097 = vpop.f32.mrb[0].mxu0
          %1098 = vdwg.mxu0
          %v1099 = vadd.f32 %v939, %v1094
          %s1100 = scalar_lea.vmem %s11, %s492
          %v1101 = vld [vmem:[%s1100] sm:$0x1]
          %s1102 = scalar_lea.vmem %s12, %s492
          %v1103 = vld [vmem:[%s1102] sm:$0x1]
          %v1104 = vsel %vm518, %v1099, 0.0
          %1105 = vadd.xlane.f32.xlu0 %v1104
          %v1106 = vpop.xlane.xlu0 %1105
          %v1107 = vmul.f32 %v1106, %v909
          %v1108 = vsub.f32 %v1099, %v1107
          %v1109 = vmul.f32 %v1108, %v1108
          %v1110 = vsel %vm518, %v1109, 0.0
          %1111 = vadd.xlane.f32.xlu0 %v1110
          %v1112 = vpop.xlane.xlu0 %1111
          %v1113 = vmul.f32 %v1112, %v909
          %v1114 = vadd.f32 %v1113, 1e-05
          %v1115 = vrsqrt.pop %v1114
          %v1116 = vmul.f32 %v1108, %v1115
          %v1118 = vlaneseq
          %v1119 = vshrl.u32 %v1118, 7
          %v1120 = vsub.s32 0, %v1119
          %v1121 = vrot.slane %v1101, %v1120
          %v1123 = vmul.f32 %v1116, %v1121
          %v1125 = vlaneseq
          %v1126 = vshrl.u32 %v1125, 7
          %v1127 = vsub.s32 0, %v1126
          %v1128 = vrot.slane %v1103, %v1127
          %v1130 = vadd.f32 %v1123, %v1128
          %v1131 = vmul.f32 %v1130, %v937
        $region81: #{tpu_custom_call.1} parent=71 // loop_footer
          %s496 = sadd.s32 1, %s492
        $region82: #{tpu_custom_call.1} parent=71 // loop_footer_branch
          %491 = sbr.rel target = $region78
        $region83: #{tpu_custom_call.1} parent=71 // loop_exit
          _
        %vm1132 = vcmask 261120
        %1133 = vst.msk [vmem:[%s479] sm:$0xff] %vm1132, %v497
        %s1134 = sand.u32 %s326, 1
        %s1135 = scalar_lea.sflag [#allocation6], %s1134
        %s1136 = sand.u32 %s326, 1
        %s1137 = smul.addr %s1136, 8
        %s1138 = scalar_lea.vmem [#allocation7], %s1137
        // Predicated region
        $region84: #{tpu_custom_call.1} parent=71 // pred_check
          %p1139 = pneg %p336
        $region85: #{tpu_custom_call.1} parent=71 // pred_check_branch
          %1141 = sbr.rel (%p1139) target = $region87
        $region86: #{tpu_custom_call.1} parent=71 // pred_region
          %s1143 = ssub.s32 128, 128
          %1144 = vsyncadd %s1135, %s1143
          %s1145 = smul.addr %s30, 128
          %s1146 = scalar_lea.hbm %s13, %s1145
          %s1148 = sshll.u32 %s1138, 4
          %s1149 = int_to_ptr.vmem [resolvable:$true] %s1148
          %1151 = dma.vmem_to_hbm [thread:$0]  %s1149, 128, %s1146, %s1135
        $region87: #{tpu_custom_call.1} parent=71 // pred_fallthru
          _
      $region72: #{tpu_custom_call.1} parent=5 // pred_fallthru
        _
      %p1152 = scmp.le.s32.totalorder 2, %s25
      // Predicated region
      $region88: #{tpu_custom_call.1} parent=5 // pred_check
        %p1153 = pneg %p1152
      $region89: #{tpu_custom_call.1} parent=5 // pred_check_branch
        %1155 = sbr.rel (%p1153) target = $region91
      $region90: #{tpu_custom_call.1} parent=5 // pred_region
        %s1156 = ssub.s32 %s25, 2
        // Predicated region
        $region92: #{tpu_custom_call.1} parent=90 // pred_check
          %p1157 = pneg %p342
        $region93: #{tpu_custom_call.1} parent=90 // pred_check_branch
          %1159 = sbr.rel (%p1157) target = $region95
        $region94: #{tpu_custom_call.1} parent=90 // pred_region
          %s1160 = sand.u32 %s327, 1
          %s1161 = scalar_lea.sflag [#allocation6], %s1160
          %s1162 = sand.u32 %s327, 1
          %s1163 = smul.addr %s1162, 8
          %s1164 = scalar_lea.vmem [#allocation7], %s1163
          %1165 = dma.done %s1161, 128
        $region95: #{tpu_custom_call.1} parent=90 // pred_fallthru
          _
      $region91: #{tpu_custom_call.1} parent=5 // pred_fallthru
        _
    $region6: #{tpu_custom_call.1} parent=1 // loop_footer
      %s29 = sadd.s32 1, %s25
    $region7: #{tpu_custom_call.1} parent=1 // loop_footer_branch
      %24 = sbr.rel target = $region3
    $region8: #{tpu_custom_call.1} parent=1 // loop_exit
      _
    %1166 = vsyncpa [#allocation5], 1
    %s1167 = scalar_lea.sflag [#allocation5], 1
    %1168 = vsyncpa %s1167, 1
    %1169 = vsyncpa [#allocation6], 1
    %s1170 = scalar_lea.sflag [#allocation6], 1
    %1171 = vsyncpa %s1170, 1

</llo_original>
